<compile_context>
chip_gen: v6e
topology: v6e:2x2x1
jax: 0.10.0
libtpu: 0.0.40
codegen_flags: <defaults>
</compile_context>

<pallas_src>
import functools

import jax
import jax.numpy as jnp
from jax.experimental import pallas as pl
from jax.experimental.pallas import tpu as pltpu

HIDDEN = 256
OUT_LANES = 128  # lane-dense padded width for the packed (action | value) output


def _round_up(x, m):
    return (x + m - 1) // m * m


def _default_elementwise_dtype():
    """bf16 elementwise on v6e/v7x (bf16 VALU/EUP); f32 on v5e and older."""
    try:
        kind = jax.devices()[0].device_kind.lower()
    except Exception:
        return jnp.float32
    if any(tag in kind for tag in ("v6", "v7", "tpu7")):
        return jnp.bfloat16
    return jnp.float32


def _ddpg_kernel(state_ref,
                 w1f_ref, b1f_ref,            # fused [actor fc1 | critic fc1 state-part]
                 aw2_ref, ab2_ref,             # actor fc2
                 aw3_ref, ab3_ref,             # actor fc3 (zero-padded to OUT_LANES)
                 cw1a_ref,                     # critic fc1 action-part (zero-padded rows)
                 cw2_ref, cb2_ref,             # critic fc2
                 cw3p_ref, cb3p_ref,           # critic fc3 packed into column act_dim
                 out_ref,                      # (TB, OUT_LANES) packed (action | value)
                 *, ew_dtype):
    acc = ew_dtype  # intermediate accumulation / elementwise dtype (bf16 on v6e/v7x)

    s = state_ref[...].astype(jnp.bfloat16)

    # Fused first layer: one MXU pass over the tiny-K state for both networks.
    h0 = jnp.dot(s, w1f_ref[...], preferred_element_type=acc) + b1f_ref[...].astype(acc)
    a_h = jnp.maximum(h0[:, :HIDDEN], 0.0)    # actor fc1 post-relu
    c_pre = h0[:, HIDDEN:]                    # critic state-path pre-activation (incl. cb1)

    # ---- Actor: fc2 -> relu -> fc3(padded, f32) -> tanh ----
    a_h = jnp.dot(a_h.astype(jnp.bfloat16), aw2_ref[...],
                  preferred_element_type=acc) + ab2_ref[...].astype(acc)
    a_h = jnp.maximum(a_h, 0.0)
    act = jnp.tanh(jnp.dot(a_h.astype(jnp.bfloat16), aw3_ref[...],
                           preferred_element_type=jnp.float32) + ab3_ref[...])
    # lanes >= act_dim of `act` are tanh(0) == 0 (zero-padded aw3/ab3 columns)

    # ---- Critic: relu(state-path + action-path) -> fc2 -> relu -> fc3 on MXU ----
    c = c_pre + jnp.dot(act.astype(jnp.bfloat16), cw1a_ref[...],
                        preferred_element_type=acc)
    c = jnp.maximum(c, 0.0)
    c = jnp.dot(c.astype(jnp.bfloat16), cw2_ref[...],
                preferred_element_type=acc) + cb2_ref[...].astype(acc)
    c = jnp.maximum(c, 0.0)
    # fc3 as an MXU pass against a (HIDDEN, OUT_LANES) weight whose only nonzero
    # column is act_dim; result lands directly in the packed value lane.
    v_pad = jnp.dot(c.astype(jnp.bfloat16), cw3p_ref[...],
                    preferred_element_type=jnp.float32) + cb3p_ref[...]

    # Pack: action in lanes [0, act_dim), value in lane act_dim -> lane-dense store.
    out_ref[...] = (act + v_pad).astype(out_ref.dtype)


def pack_params(p, obs_dim, act_dim):
    """Build kernel-ready weights: fused/padded layout, bf16 weights, f32 biases."""
    assert act_dim + 1 <= OUT_LANES, "act_dim must leave room for the packed value lane"
    w1f = jnp.concatenate([p["aw1"], p["cw1s"]], axis=1).astype(jnp.bfloat16)   # (obs, 512)
    b1f = jnp.concatenate([p["ab1"], p["cb1"]], axis=1).astype(jnp.float32)     # (1, 512)
    aw2 = p["aw2"].astype(jnp.bfloat16)
    ab2 = p["ab2"].astype(jnp.float32)
    # Zero padding of aw3/ab3 columns >= act_dim is REQUIRED so tanh(0)==0 in the
    # value lane of the packed output.
    aw3 = (jnp.zeros((HIDDEN, OUT_LANES), jnp.float32)
           .at[:, :act_dim].set(p["aw3"]).astype(jnp.bfloat16))                 # padded N
    ab3 = jnp.zeros((1, OUT_LANES), jnp.float32).at[:, :act_dim].set(p["ab3"])
    cw1a = (jnp.zeros((OUT_LANES, HIDDEN), jnp.float32)
            .at[:act_dim, :].set(p["cw1a"]).astype(jnp.bfloat16))               # padded K
    cw2 = p["cw2"].astype(jnp.bfloat16)
    cb2 = p["cb2"].astype(jnp.float32)
    # Critic fc3 packed for the MXU: column act_dim holds cw3, everything else zero.
    cw3p = (jnp.zeros((HIDDEN, OUT_LANES), jnp.float32)
            .at[:, act_dim].set(p["cw3"][:, 0]).astype(jnp.bfloat16))
    cb3p = jnp.zeros((1, OUT_LANES), jnp.float32).at[0, act_dim].set(p["cb3"][0, 0])
    return dict(w1f=w1f, b1f=b1f, aw2=aw2, ab2=ab2, aw3=aw3, ab3=ab3,
                cw1a=cw1a, cw2=cw2, cb2=cb2, cw3p=cw3p, cb3p=cb3p)


def ddpg_forward(state, packed, act_dim, *, tile_b=1024, ew_dtype=None,
                 vmem_limit_bytes=32 * 1024 * 1024, return_packed=False):
    """state: (B, obs_dim) f32. Returns (action (B, act_dim) f32, value (B, 1) f32),
    or the packed (B, OUT_LANES) slab if return_packed=True (avoids re-slicing)."""
    B, obs_dim = state.shape
    if ew_dtype is None:
        ew_dtype = _default_elementwise_dtype()

    # Tile choice: as large as tile_b, but never larger than ceil(B/2) rounded up to 8
    # so the grid has >= 2 steps and the "parallel" batch axis can split across both
    # TensorCores on v7x.  Per-tile VMEM at tb=1024 is ~2-3 MiB -> fits every chip.
    tb = max(8, min(tile_b, _round_up(pl.cdiv(B, 2), 8)))
    b_pad = _round_up(B, tb)
    if b_pad != B:
        state = jnp.pad(state, ((0, b_pad - B), (0, 0)))
    grid = (b_pad // tb,)

    args = (state,
            packed["w1f"], packed["b1f"], packed["aw2"], packed["ab2"],
            packed["aw3"], packed["ab3"], packed["cw1a"],
            packed["cw2"], packed["cb2"], packed["cw3p"], packed["cb3p"])

    const_map = lambda i: (0, 0)               # weights stay VMEM-resident across tiles
    in_specs = [pl.BlockSpec((tb, obs_dim), lambda i: (i, 0))]
    in_specs += [pl.BlockSpec(a.shape, const_map) for a in args[1:]]
    out_specs = pl.BlockSpec((tb, OUT_LANES), lambda i: (i, 0))

    # Advisory cost hint so XLA schedules the custom call sensibly.
    flops = 2 * b_pad * (obs_dim * 2 * HIDDEN        # fused first layer
                         + HIDDEN * HIDDEN           # actor fc2
                         + HIDDEN * OUT_LANES        # actor fc3 (padded)
                         + OUT_LANES * HIDDEN        # critic fc1 action-path
                         + HIDDEN * HIDDEN           # critic fc2
                         + HIDDEN * OUT_LANES)       # critic fc3 (padded MXU pass)
    weight_bytes = sum(int(a.size) * a.dtype.itemsize for a in args[1:])
    bytes_accessed = int(state.size) * 4 + weight_bytes + b_pad * OUT_LANES * 4
    cost = pl.CostEstimate(flops=flops,
                           transcendentals=b_pad * OUT_LANES,
                           bytes_accessed=bytes_accessed)

    packed_out = pl.pallas_call(
        functools.partial(_ddpg_kernel, ew_dtype=ew_dtype),
        out_shape=jax.ShapeDtypeStruct((b_pad, OUT_LANES), jnp.float32),
        grid=grid,
        in_specs=in_specs,
        out_specs=out_specs,
        compiler_params=pltpu.CompilerParams(
            dimension_semantics=("parallel",),   # shards batch tiles across TCs on v7x
            vmem_limit_bytes=vmem_limit_bytes),
        cost_estimate=cost,
    )(*args)

    if return_packed:
        return packed_out[:B]
    action = packed_out[:B, :act_dim]
    value = packed_out[:B, act_dim:act_dim + 1]
    return action, value


def _linear_init(key, fan_in, fan_out):
    """PyTorch nn.Linear default init: U(-1/sqrt(fan_in), 1/sqrt(fan_in))."""
    kw, kb = jax.random.split(key)
    bound = 1.0 / jnp.sqrt(jnp.float32(fan_in))
    W = jax.random.uniform(kw, (fan_in, fan_out), jnp.float32, -bound, bound)
    b = jax.random.uniform(kb, (1, fan_out), jnp.float32, -bound, bound)
    return W, b


def init_ddpg_params(key, obs_dim, act_dim):
    keys = jax.random.split(key, 6)
    # Actor
    aw1, ab1 = _linear_init(keys[0], obs_dim, HIDDEN)
    aw2, ab2 = _linear_init(keys[1], HIDDEN, HIDDEN)
    aw3, ab3 = _linear_init(keys[2], HIDDEN, act_dim)
    # Critic (first layer takes obs_dim + act_dim; split weight into state/action parts)
    cw1, cb1 = _linear_init(keys[3], obs_dim + act_dim, HIDDEN)
    cw1s, cw1a = cw1[:obs_dim, :], cw1[obs_dim:, :]
    cw2, cb2 = _linear_init(keys[4], HIDDEN, HIDDEN)
    cw3, cb3 = _linear_init(keys[5], HIDDEN, 1)
    return dict(aw1=aw1, ab1=ab1, aw2=aw2, ab2=ab2, aw3=aw3, ab3=ab3,
                cw1s=cw1s, cw1a=cw1a, cb1=cb1, cw2=cw2, cb2=cb2, cw3=cw3, cb3=cb3)


def ddpg_reference(state, p, ew_dtype=jnp.float32):
    """Plain-JAX reference mirroring the kernel's bf16-weight / ew_dtype numerics.
    (Note: bf16 weights are a numerics deviation from a pure-f32 torch DDPG.)"""
    def bdot(x, w, out_dtype):
        return jnp.dot(x.astype(jnp.bfloat16), w.astype(jnp.bfloat16),
                       preferred_element_type=out_dtype)
    h = jax.nn.relu(bdot(state, p["aw1"], ew_dtype) + p["ab1"].astype(ew_dtype))
    h = jax.nn.relu(bdot(h, p["aw2"], ew_dtype) + p["ab2"].astype(ew_dtype))
    a = jnp.tanh(bdot(h, p["aw3"], jnp.float32) + p["ab3"])
    c = jax.nn.relu(bdot(state, p["cw1s"], ew_dtype) + bdot(a, p["cw1a"], ew_dtype)
                    + p["cb1"].astype(ew_dtype))
    c = jax.nn.relu(bdot(c, p["cw2"], ew_dtype) + p["cb2"].astype(ew_dtype))
    v = bdot(c, p["cw3"], jnp.float32) + p["cb3"]
    return a.astype(jnp.float32), v


if __name__ == "__main__":
    obs_dim, act_dim, batch = 16, 4, 64
    key = jax.random.PRNGKey(0)
    k_state, k_params = jax.random.split(key)

    state = jax.random.normal(k_state, (batch, obs_dim), jnp.float32)
    params = init_ddpg_params(k_params, obs_dim, act_dim)
    packed = pack_params(params, obs_dim, act_dim)

    ew_dtype = _default_elementwise_dtype()
    # batch=64 -> tb=32 -> grid of 2 batch tiles (exercises pipelining + both TCs on v7x)
    action, value = ddpg_forward(state, packed, act_dim, ew_dtype=ew_dtype)
    action = jax.block_until_ready(action)
    value = jax.block_until_ready(value)

    a_ref, v_ref = ddpg_reference(state, params, ew_dtype)
    assert action.shape == (batch, act_dim) and value.shape == (batch, 1)
    assert jnp.allclose(action, a_ref, atol=2e-2, rtol=2e-2), "action mismatch vs reference"
    assert jnp.allclose(value, v_ref, atol=2e-2, rtol=2e-2), "value mismatch vs reference"

    print("KERNEL_OK")
</pallas_src>

<mosaic_0001>
module attributes {stable_mosaic.version = 11 : i64} {
  func.func @_ddpg_kernel(%arg0: i32, %arg1: memref<32x16xf32, #tpu.memory_space<vmem>>, %arg2: memref<16x512xbf16, #tpu.memory_space<vmem>>, %arg3: memref<1x512xf32, #tpu.memory_space<vmem>>, %arg4: memref<256x256xbf16, #tpu.memory_space<vmem>>, %arg5: memref<1x256xf32, #tpu.memory_space<vmem>>, %arg6: memref<256x128xbf16, #tpu.memory_space<vmem>>, %arg7: memref<1x128xf32, #tpu.memory_space<vmem>>, %arg8: memref<128x256xbf16, #tpu.memory_space<vmem>>, %arg9: memref<256x256xbf16, #tpu.memory_space<vmem>>, %arg10: memref<1x256xf32, #tpu.memory_space<vmem>>, %arg11: memref<256x128xbf16, #tpu.memory_space<vmem>>, %arg12: memref<1x128xf32, #tpu.memory_space<vmem>>, %arg13: memref<32x128xf32, #tpu.memory_space<vmem>>) attributes {dimension_semantics = [#tpu.dimension_semantics<parallel>], iteration_bounds = array<i64: 2>, scalar_prefetch = 0 : i64, scratch_operands = 0 : i64, tpu.core_type = #tpu.core_type<tc>, window_params = [{transform_indices = @transform_0, window_bounds = array<i64: 32, 16>}, {pipeline_mode = #tpu.pipeline_mode<synchronous>, transform_indices = @transform_1, window_bounds = array<i64: 16, 512>}, {pipeline_mode = #tpu.pipeline_mode<synchronous>, transform_indices = @transform_2, window_bounds = array<i64: 1, 512>}, {pipeline_mode = #tpu.pipeline_mode<synchronous>, transform_indices = @transform_3, window_bounds = array<i64: 256, 256>}, {pipeline_mode = #tpu.pipeline_mode<synchronous>, transform_indices = @transform_4, window_bounds = array<i64: 1, 256>}, {pipeline_mode = #tpu.pipeline_mode<synchronous>, transform_indices = @transform_5, window_bounds = array<i64: 256, 128>}, {pipeline_mode = #tpu.pipeline_mode<synchronous>, transform_indices = @transform_6, window_bounds = array<i64: 1, 128>}, {pipeline_mode = #tpu.pipeline_mode<synchronous>, transform_indices = @transform_7, window_bounds = array<i64: 128, 256>}, {pipeline_mode = #tpu.pipeline_mode<synchronous>, transform_indices = @transform_8, window_bounds = array<i64: 256, 256>}, {pipeline_mode = #tpu.pipeline_mode<synchronous>, transform_indices = @transform_9, window_bounds = array<i64: 1, 256>}, {pipeline_mode = #tpu.pipeline_mode<synchronous>, transform_indices = @transform_10, window_bounds = array<i64: 256, 128>}, {pipeline_mode = #tpu.pipeline_mode<synchronous>, transform_indices = @transform_11, window_bounds = array<i64: 1, 128>}, {transform_indices = @transform_12, window_bounds = array<i64: 32, 128>}]} {
    %c0 = arith.constant 0 : index
    %c0_0 = arith.constant 0 : index
    %0 = vector.load %arg1[%c0, %c0_0] : memref<32x16xf32, #tpu.memory_space<vmem>>, vector<32x16xf32>
    %1 = arith.truncf %0 : vector<32x16xf32> to vector<32x16xbf16>
    %c0_1 = arith.constant 0 : index
    %c0_2 = arith.constant 0 : index
    %2 = vector.load %arg2[%c0_1, %c0_2] : memref<16x512xbf16, #tpu.memory_space<vmem>>, vector<16x512xbf16>
    %cst = arith.constant dense<0.000000e+00> : vector<32x512xf32>
    %3 = tpu.matmul %1, %2, %cst {dimension_numbers = #tpu.dot_dimension_numbers<[1], [0], [0], [1], [0, 0, 1, 1], [], []>} : vector<32x16xbf16>, vector<16x512xbf16>, vector<32x512xf32> -> vector<32x512xf32>
    %c0_3 = arith.constant 0 : index
    %c0_4 = arith.constant 0 : index
    %4 = vector.load %arg3[%c0_3, %c0_4] : memref<1x512xf32, #tpu.memory_space<vmem>>, vector<1x512xf32>
    %5 = vector.broadcast %4 : vector<1x512xf32> to vector<32x512xf32>
    %6 = arith.addf %3, %5 : vector<32x512xf32>
    %7 = vector.extract_strided_slice %6 {offsets = [0, 0], sizes = [32, 256], strides = [1, 1]} : vector<32x512xf32> to vector<32x256xf32>
    %cst_5 = arith.constant 0.000000e+00 : f32
    %8 = vector.broadcast %cst_5 : f32 to vector<32x256xf32>
    %9 = arith.maximumf %7, %8 : vector<32x256xf32>
    %10 = vector.extract_strided_slice %6 {offsets = [0, 256], sizes = [32, 256], strides = [1, 1]} : vector<32x512xf32> to vector<32x256xf32>
    %11 = arith.truncf %9 : vector<32x256xf32> to vector<32x256xbf16>
    %c0_6 = arith.constant 0 : index
    %c0_7 = arith.constant 0 : index
    %12 = vector.load %arg4[%c0_6, %c0_7] : memref<256x256xbf16, #tpu.memory_space<vmem>>, vector<256x256xbf16>
    %cst_8 = arith.constant dense<0.000000e+00> : vector<32x256xf32>
    %13 = tpu.matmul %11, %12, %cst_8 {dimension_numbers = #tpu.dot_dimension_numbers<[1], [0], [0], [1], [0, 0, 1, 1], [], []>} : vector<32x256xbf16>, vector<256x256xbf16>, vector<32x256xf32> -> vector<32x256xf32>
    %c0_9 = arith.constant 0 : index
    %c0_10 = arith.constant 0 : index
    %14 = vector.load %arg5[%c0_9, %c0_10] : memref<1x256xf32, #tpu.memory_space<vmem>>, vector<1x256xf32>
    %15 = vector.broadcast %14 : vector<1x256xf32> to vector<32x256xf32>
    %16 = arith.addf %13, %15 : vector<32x256xf32>
    %cst_11 = arith.constant 0.000000e+00 : f32
    %17 = vector.broadcast %cst_11 : f32 to vector<32x256xf32>
    %18 = arith.maximumf %16, %17 : vector<32x256xf32>
    %19 = arith.truncf %18 : vector<32x256xf32> to vector<32x256xbf16>
    %c0_12 = arith.constant 0 : index
    %c0_13 = arith.constant 0 : index
    %20 = vector.load %arg6[%c0_12, %c0_13] : memref<256x128xbf16, #tpu.memory_space<vmem>>, vector<256x128xbf16>
    %cst_14 = arith.constant dense<0.000000e+00> : vector<32x128xf32>
    %21 = tpu.matmul %19, %20, %cst_14 {dimension_numbers = #tpu.dot_dimension_numbers<[1], [0], [0], [1], [0, 0, 1, 1], [], []>} : vector<32x256xbf16>, vector<256x128xbf16>, vector<32x128xf32> -> vector<32x128xf32>
    %c0_15 = arith.constant 0 : index
    %c0_16 = arith.constant 0 : index
    %22 = vector.load %arg7[%c0_15, %c0_16] : memref<1x128xf32, #tpu.memory_space<vmem>>, vector<1x128xf32>
    %23 = vector.broadcast %22 : vector<1x128xf32> to vector<32x128xf32>
    %24 = arith.addf %21, %23 : vector<32x128xf32>
    %25 = math.tanh %24 : vector<32x128xf32>
    %26 = arith.truncf %25 : vector<32x128xf32> to vector<32x128xbf16>
    %c0_17 = arith.constant 0 : index
    %c0_18 = arith.constant 0 : index
    %27 = vector.load %arg8[%c0_17, %c0_18] : memref<128x256xbf16, #tpu.memory_space<vmem>>, vector<128x256xbf16>
    %cst_19 = arith.constant dense<0.000000e+00> : vector<32x256xf32>
    %28 = tpu.matmul %26, %27, %cst_19 {dimension_numbers = #tpu.dot_dimension_numbers<[1], [0], [0], [1], [0, 0, 1, 1], [], []>} : vector<32x128xbf16>, vector<128x256xbf16>, vector<32x256xf32> -> vector<32x256xf32>
    %29 = arith.addf %10, %28 : vector<32x256xf32>
    %cst_20 = arith.constant 0.000000e+00 : f32
    %30 = vector.broadcast %cst_20 : f32 to vector<32x256xf32>
    %31 = arith.maximumf %29, %30 : vector<32x256xf32>
    %32 = arith.truncf %31 : vector<32x256xf32> to vector<32x256xbf16>
    %c0_21 = arith.constant 0 : index
    %c0_22 = arith.constant 0 : index
    %33 = vector.load %arg9[%c0_21, %c0_22] : memref<256x256xbf16, #tpu.memory_space<vmem>>, vector<256x256xbf16>
    %cst_23 = arith.constant dense<0.000000e+00> : vector<32x256xf32>
    %34 = tpu.matmul %32, %33, %cst_23 {dimension_numbers = #tpu.dot_dimension_numbers<[1], [0], [0], [1], [0, 0, 1, 1], [], []>} : vector<32x256xbf16>, vector<256x256xbf16>, vector<32x256xf32> -> vector<32x256xf32>
    %c0_24 = arith.constant 0 : index
    %c0_25 = arith.constant 0 : index
    %35 = vector.load %arg10[%c0_24, %c0_25] : memref<1x256xf32, #tpu.memory_space<vmem>>, vector<1x256xf32>
    %36 = vector.broadcast %35 : vector<1x256xf32> to vector<32x256xf32>
    %37 = arith.addf %34, %36 : vector<32x256xf32>
    %cst_26 = arith.constant 0.000000e+00 : f32
    %38 = vector.broadcast %cst_26 : f32 to vector<32x256xf32>
    %39 = arith.maximumf %37, %38 : vector<32x256xf32>
    %40 = arith.truncf %39 : vector<32x256xf32> to vector<32x256xbf16>
    %c0_27 = arith.constant 0 : index
    %c0_28 = arith.constant 0 : index
    %41 = vector.load %arg11[%c0_27, %c0_28] : memref<256x128xbf16, #tpu.memory_space<vmem>>, vector<256x128xbf16>
    %cst_29 = arith.constant dense<0.000000e+00> : vector<32x128xf32>
    %42 = tpu.matmul %40, %41, %cst_29 {dimension_numbers = #tpu.dot_dimension_numbers<[1], [0], [0], [1], [0, 0, 1, 1], [], []>} : vector<32x256xbf16>, vector<256x128xbf16>, vector<32x128xf32> -> vector<32x128xf32>
    %c0_30 = arith.constant 0 : index
    %c0_31 = arith.constant 0 : index
    %43 = vector.load %arg12[%c0_30, %c0_31] : memref<1x128xf32, #tpu.memory_space<vmem>>, vector<1x128xf32>
    %44 = vector.broadcast %43 : vector<1x128xf32> to vector<32x128xf32>
    %45 = arith.addf %42, %44 : vector<32x128xf32>
    %46 = arith.addf %25, %45 : vector<32x128xf32>
    %c0_32 = arith.constant 0 : index
    %c0_33 = arith.constant 0 : index
    %47 = vector.load %arg13[%c0_32, %c0_33] : memref<32x128xf32, #tpu.memory_space<vmem>>, vector<32x128xf32>
    tpu.vector_store %arg13[%c0_32, %c0_33], %46 {strides = array<i32>} : memref<32x128xf32, #tpu.memory_space<vmem>>, vector<32x128xf32>,
    return
  }
  func.func @transform_0(%arg0: i32) -> (i32, i32) {
    %c0_i32 = arith.constant 0 : i32
    %c0_i32_0 = arith.constant 0 : i32
    return %arg0, %c0_i32 : i32, i32
  }
  func.func @transform_1(%arg0: i32) -> (i32, i32) {
    %c0_i32 = arith.constant 0 : i32
    %c0_i32_0 = arith.constant 0 : i32
    %c0_i32_1 = arith.constant 0 : i32
    return %c0_i32, %c0_i32_0 : i32, i32
  }
  func.func @transform_2(%arg0: i32) -> (i32, i32) {
    %c0_i32 = arith.constant 0 : i32
    %c0_i32_0 = arith.constant 0 : i32
    %c0_i32_1 = arith.constant 0 : i32
    return %c0_i32, %c0_i32_0 : i32, i32
  }
  func.func @transform_3(%arg0: i32) -> (i32, i32) {
    %c0_i32 = arith.constant 0 : i32
    %c0_i32_0 = arith.constant 0 : i32
    %c0_i32_1 = arith.constant 0 : i32
    return %c0_i32, %c0_i32_0 : i32, i32
  }
  func.func @transform_4(%arg0: i32) -> (i32, i32) {
    %c0_i32 = arith.constant 0 : i32
    %c0_i32_0 = arith.constant 0 : i32
    %c0_i32_1 = arith.constant 0 : i32
    return %c0_i32, %c0_i32_0 : i32, i32
  }
  func.func @transform_5(%arg0: i32) -> (i32, i32) {
    %c0_i32 = arith.constant 0 : i32
    %c0_i32_0 = arith.constant 0 : i32
    %c0_i32_1 = arith.constant 0 : i32
    return %c0_i32, %c0_i32_0 : i32, i32
  }
  func.func @transform_6(%arg0: i32) -> (i32, i32) {
    %c0_i32 = arith.constant 0 : i32
    %c0_i32_0 = arith.constant 0 : i32
    %c0_i32_1 = arith.constant 0 : i32
    return %c0_i32, %c0_i32_0 : i32, i32
  }
  func.func @transform_7(%arg0: i32) -> (i32, i32) {
    %c0_i32 = arith.constant 0 : i32
    %c0_i32_0 = arith.constant 0 : i32
    %c0_i32_1 = arith.constant 0 : i32
    return %c0_i32, %c0_i32_0 : i32, i32
  }
  func.func @transform_8(%arg0: i32) -> (i32, i32) {
    %c0_i32 = arith.constant 0 : i32
    %c0_i32_0 = arith.constant 0 : i32
    %c0_i32_1 = arith.constant 0 : i32
    return %c0_i32, %c0_i32_0 : i32, i32
  }
  func.func @transform_9(%arg0: i32) -> (i32, i32) {
    %c0_i32 = arith.constant 0 : i32
    %c0_i32_0 = arith.constant 0 : i32
    %c0_i32_1 = arith.constant 0 : i32
    return %c0_i32, %c0_i32_0 : i32, i32
  }
  func.func @transform_10(%arg0: i32) -> (i32, i32) {
    %c0_i32 = arith.constant 0 : i32
    %c0_i32_0 = arith.constant 0 : i32
    %c0_i32_1 = arith.constant 0 : i32
    return %c0_i32, %c0_i32_0 : i32, i32
  }
  func.func @transform_11(%arg0: i32) -> (i32, i32) {
    %c0_i32 = arith.constant 0 : i32
    %c0_i32_0 = arith.constant 0 : i32
    %c0_i32_1 = arith.constant 0 : i32
    return %c0_i32, %c0_i32_0 : i32, i32
  }
  func.func @transform_12(%arg0: i32) -> (i32, i32) {
    %c0_i32 = arith.constant 0 : i32
    %c0_i32_0 = arith.constant 0 : i32
    return %arg0, %c0_i32 : i32, i32
  }
}

</mosaic_0001>

<llo_original>
// kernel: tpu_custom_call.1
$region0: #{tpu_custom_call.1}
  #allocation0 [shape = 'u32[]', space=smem, size = 0x4, offset = 0x4, fixed_abs, tag = 'smem constant byte address 0x4 - core index']
  #allocation1 [shape = 'u32[144,128]{1,0:T(1,128)}', space=vmem, size = 0x12000, scoped, tag = 'internal scratch']
  %s0 = inlined_call_operand.vmem [shape: f32[64,16], index: 0, kind: input, shape index: {}]
  %s1 = inlined_call_operand.vmem [shape: bf16[16,512], index: 1, kind: input, shape index: {}]
  %s2 = inlined_call_operand.vmem [shape: f32[1,512], index: 2, kind: input, shape index: {}]
  %s3 = inlined_call_operand.hbm [shape: bf16[256,256], index: 3, kind: input, shape index: {}]
  %s4 = inlined_call_operand.vmem [shape: f32[1,256], index: 4, kind: input, shape index: {}]
  %s5 = inlined_call_operand.hbm [shape: bf16[256,128], index: 5, kind: input, shape index: {}]
  %s6 = inlined_call_operand.vmem [shape: f32[1,128], index: 6, kind: input, shape index: {}]
  %s7 = inlined_call_operand.hbm [shape: bf16[128,256], index: 7, kind: input, shape index: {}]
  %s8 = inlined_call_operand.hbm [shape: bf16[256,256], index: 8, kind: input, shape index: {}]
  %s9 = inlined_call_operand.vmem [shape: f32[1,256], index: 9, kind: input, shape index: {}]
  %s10 = inlined_call_operand.hbm [shape: bf16[256,128], index: 10, kind: input, shape index: {}]
  %s11 = inlined_call_operand.vmem [shape: f32[1,128], index: 11, kind: input, shape index: {}]
  %s12 = inlined_call_operand.hbm [shape: f32[64,128], index: 12, kind: output, shape index: {}]
  %s13 = sld [smem:[#allocation0]]
  $region101: #{tpu_custom_call.1} parent=0
    _
  %s15 = ssub.s32 1, %s13
  %s16 = scalar_select 0, %s15, %s13
  $region1: #{tpu_custom_call.1} parent=0
    #allocation2 [shape = 'u8[131072]{0}', space=vmem, size = 0x20000, scoped, tag = 'input window, operand 3, single buffered']
    #allocation3 [shape = 's32[2]{0}', space=sflag, size = 0x8, scoped, tag = 'scoped memory for tpu_custom_call.1']
    #allocation4 [shape = 's32[2]{0}', space=sflag, size = 0x8, scoped, tag = 'scoped memory for tpu_custom_call.1']
    #allocation5 [shape = 'u8[65536]{0}', space=vmem, size = 0x10000, scoped, tag = 'input window, operand 5, single buffered']
    #allocation6 [shape = 's32[1]{0}', space=sflag, size = 0x4, scoped, tag = 'scoped memory for tpu_custom_call.1']
    #allocation7 [shape = 'u8[65536]{0}', space=vmem, size = 0x10000, scoped, tag = 'input window, operand 7, single buffered']
    #allocation8 [shape = 'u8[131072]{0}', space=vmem, size = 0x20000, scoped, tag = 'input window, operand 8, single buffered']
    #allocation9 [shape = 's32[1]{0}', space=sflag, size = 0x4, scoped, tag = 'scoped memory for tpu_custom_call.1']
    #allocation10 [shape = 'u8[65536]{0}', space=vmem, size = 0x10000, scoped, tag = 'input window, operand 10, single buffered']
    #allocation11 [shape = 'u8[32768]{0}', space=vmem, size = 0x8000, scoped, tag = 'output window, operand 0']
    %17 = vsyncpa [#allocation3], 0
    %18 = vsyncpa [#allocation6], 0
    %19 = vsyncpa [#allocation9], 0
    %20 = vsyncpa [#allocation4], 0
    %s21 = scalar_lea.sflag [#allocation4], 1
    %22 = vsyncpa %s21, 0
    loop: start=0, step=1, limit=4
    $region2: #{tpu_custom_call.1} parent=1 // loop_pre_header
      _
    $region3: #{tpu_custom_call.1} parent=1 // loop_header
      %s24 = sphi 0, %s28
      %p25 = scmp.ge.s32.totalorder %s24, 4
      %s34 = sphi 0, %s36
      %s37 = sphi 0, %s34
      %s38 = sphi 0, %s37
      %s54 = sphi 0, %s38
      %s58 = sphi 0, %s58
      %s60 = sphi 0, %s58
      %s61 = sphi 0, %s60
      %s75 = sphi 0, %s61
      %s79 = sphi 0, %s79
      %s81 = sphi 0, %s79
      %s82 = sphi 0, %s81
      %s96 = sphi 0, %s82
      %s100 = sphi 0, %s100
      %s102 = sphi 0, %s100
      %s103 = sphi 0, %s102
      %s117 = sphi 0, %s103
      %s121 = sphi 0, %s121
      %s123 = sphi 0, %s121
      %s124 = sphi 0, %s123
      %s138 = sphi 0, %s124
      %s142 = sphi 0, %s142
      %s144 = sphi 0, %s142
      %s145 = sphi 0, %s144
      %s159 = sphi 0, %s145
      %s163 = sphi 0, %s163
      %s165 = sphi 0, %s163
      %s166 = sphi 0, %s165
      %s180 = sphi 0, %s166
      %s184 = sphi 0, %s184
      %s186 = sphi 0, %s184
      %s187 = sphi 0, %s186
      %s201 = sphi 0, %s187
      %s205 = sphi 0, %s205
      %s207 = sphi 0, %s205
      %s208 = sphi 0, %s207
      %s222 = sphi 0, %s208
      %s226 = sphi 0, %s226
      %s228 = sphi 0, %s226
      %s229 = sphi 0, %s228
      %s243 = sphi 0, %s229
      %s247 = sphi 0, %s247
      %s249 = sphi 0, %s247
      %s250 = sphi 0, %s249
      %s264 = sphi 0, %s250
      %s268 = sphi 0, %s268
      %s270 = sphi 0, %s268
      %s271 = sphi 0, %s270
      %s285 = sphi 0, %s271
      %s291 = sphi 0, %s293
      %s294 = sphi 0, %s291
      %s295 = sphi 0, %s294
      %s311 = sphi 0, %s295
    $region4: #{tpu_custom_call.1} parent=1 // loop_header_branch
      %27 = sbr.rel (%p25) target = $region8
    $region5: #{tpu_custom_call.1} parent=1 // loop_body
      %s29 = ssub.s32 %s24, 1
      %s30 = ssub.s32 %s24, 2
      %s31 = sadd.s32 %s24, 1
      %s32 = ssub.s32 %s24, %s31
      %p33 = scmp.eq.s32.totalorder %s32, 0
      %s35 = sadd.s32 %s34, 1
      %s36 = scalar_select %p33, %s34, %s35
      %p39 = pneg %p33
      %p40 = scmp.eq.s32.totalorder %s24, 1
      %p41 = por %p39, %p40
      %p42 = scmp.ne.s32.totalorder %s34, %s37
      %p43 = scmp.eq.s32.totalorder %s24, 0
      %p44 = por %p42, %p43
      %p45 = scmp.ne.s32.totalorder %s34, %s37
      %p46 = scmp.eq.s32.totalorder %s29, 1
      %p47 = por %p45, %p46
      %p48 = scmp.ne.s32.totalorder %s37, %s38
      %p49 = scmp.eq.s32.totalorder %s29, 0
      %p50 = por %p48, %p49
      %p51 = scmp.ne.s32.totalorder %s37, %s38
      %p52 = scmp.eq.s32.totalorder %s30, 1
      %p53 = por %p51, %p52
      %p55 = scmp.ne.s32.totalorder %s38, %s54
      %p56 = scmp.eq.s32.totalorder %s30, 0
      %p57 = por %p55, %p56
      %s59 = sadd.s32 %s58, 1
      %p62 = scmp.eq.s32.totalorder %s24, 1
      %p63 = scmp.ne.s32.totalorder %s58, %s60
      %p64 = scmp.eq.s32.totalorder %s24, 0
      %p65 = por %p63, %p64
      %p66 = scmp.ne.s32.totalorder %s58, %s60
      %p67 = scmp.eq.s32.totalorder %s29, 1
      %p68 = por %p66, %p67
      %p69 = scmp.ne.s32.totalorder %s60, %s61
      %p70 = scmp.eq.s32.totalorder %s29, 0
      %p71 = por %p69, %p70
      %p72 = scmp.ne.s32.totalorder %s60, %s61
      %p73 = scmp.eq.s32.totalorder %s30, 1
      %p74 = por %p72, %p73
      %p76 = scmp.ne.s32.totalorder %s61, %s75
      %p77 = scmp.eq.s32.totalorder %s30, 0
      %p78 = por %p76, %p77
      %s80 = sadd.s32 %s79, 1
      %p83 = scmp.eq.s32.totalorder %s24, 1
      %p84 = scmp.ne.s32.totalorder %s79, %s81
      %p85 = scmp.eq.s32.totalorder %s24, 0
      %p86 = por %p84, %p85
      %p87 = scmp.ne.s32.totalorder %s79, %s81
      %p88 = scmp.eq.s32.totalorder %s29, 1
      %p89 = por %p87, %p88
      %p90 = scmp.ne.s32.totalorder %s81, %s82
      %p91 = scmp.eq.s32.totalorder %s29, 0
      %p92 = por %p90, %p91
      %p93 = scmp.ne.s32.totalorder %s81, %s82
      %p94 = scmp.eq.s32.totalorder %s30, 1
      %p95 = por %p93, %p94
      %p97 = scmp.ne.s32.totalorder %s82, %s96
      %p98 = scmp.eq.s32.totalorder %s30, 0
      %p99 = por %p97, %p98
      %s101 = sadd.s32 %s100, 1
      %p104 = scmp.eq.s32.totalorder %s24, 1
      %p105 = scmp.ne.s32.totalorder %s100, %s102
      %p106 = scmp.eq.s32.totalorder %s24, 0
      %p107 = por %p105, %p106
      %p108 = scmp.ne.s32.totalorder %s100, %s102
      %p109 = scmp.eq.s32.totalorder %s29, 1
      %p110 = por %p108, %p109
      %p111 = scmp.ne.s32.totalorder %s102, %s103
      %p112 = scmp.eq.s32.totalorder %s29, 0
      %p113 = por %p111, %p112
      %p114 = scmp.ne.s32.totalorder %s102, %s103
      %p115 = scmp.eq.s32.totalorder %s30, 1
      %p116 = por %p114, %p115
      %p118 = scmp.ne.s32.totalorder %s103, %s117
      %p119 = scmp.eq.s32.totalorder %s30, 0
      %p120 = por %p118, %p119
      %s122 = sadd.s32 %s121, 1
      %p125 = scmp.eq.s32.totalorder %s24, 1
      %p126 = scmp.ne.s32.totalorder %s121, %s123
      %p127 = scmp.eq.s32.totalorder %s24, 0
      %p128 = por %p126, %p127
      %p129 = scmp.ne.s32.totalorder %s121, %s123
      %p130 = scmp.eq.s32.totalorder %s29, 1
      %p131 = por %p129, %p130
      %p132 = scmp.ne.s32.totalorder %s123, %s124
      %p133 = scmp.eq.s32.totalorder %s29, 0
      %p134 = por %p132, %p133
      %p135 = scmp.ne.s32.totalorder %s123, %s124
      %p136 = scmp.eq.s32.totalorder %s30, 1
      %p137 = por %p135, %p136
      %p139 = scmp.ne.s32.totalorder %s124, %s138
      %p140 = scmp.eq.s32.totalorder %s30, 0
      %p141 = por %p139, %p140
      %s143 = sadd.s32 %s142, 1
      %p146 = scmp.eq.s32.totalorder %s24, 1
      %p147 = scmp.ne.s32.totalorder %s142, %s144
      %p148 = scmp.eq.s32.totalorder %s24, 0
      %p149 = por %p147, %p148
      %p150 = scmp.ne.s32.totalorder %s142, %s144
      %p151 = scmp.eq.s32.totalorder %s29, 1
      %p152 = por %p150, %p151
      %p153 = scmp.ne.s32.totalorder %s144, %s145
      %p154 = scmp.eq.s32.totalorder %s29, 0
      %p155 = por %p153, %p154
      %p156 = scmp.ne.s32.totalorder %s144, %s145
      %p157 = scmp.eq.s32.totalorder %s30, 1
      %p158 = por %p156, %p157
      %p160 = scmp.ne.s32.totalorder %s145, %s159
      %p161 = scmp.eq.s32.totalorder %s30, 0
      %p162 = por %p160, %p161
      %s164 = sadd.s32 %s163, 1
      %p167 = scmp.eq.s32.totalorder %s24, 1
      %p168 = scmp.ne.s32.totalorder %s163, %s165
      %p169 = scmp.eq.s32.totalorder %s24, 0
      %p170 = por %p168, %p169
      %p171 = scmp.ne.s32.totalorder %s163, %s165
      %p172 = scmp.eq.s32.totalorder %s29, 1
      %p173 = por %p171, %p172
      %p174 = scmp.ne.s32.totalorder %s165, %s166
      %p175 = scmp.eq.s32.totalorder %s29, 0
      %p176 = por %p174, %p175
      %p177 = scmp.ne.s32.totalorder %s165, %s166
      %p178 = scmp.eq.s32.totalorder %s30, 1
      %p179 = por %p177, %p178
      %p181 = scmp.ne.s32.totalorder %s166, %s180
      %p182 = scmp.eq.s32.totalorder %s30, 0
      %p183 = por %p181, %p182
      %s185 = sadd.s32 %s184, 1
      %p188 = scmp.eq.s32.totalorder %s24, 1
      %p189 = scmp.ne.s32.totalorder %s184, %s186
      %p190 = scmp.eq.s32.totalorder %s24, 0
      %p191 = por %p189, %p190
      %p192 = scmp.ne.s32.totalorder %s184, %s186
      %p193 = scmp.eq.s32.totalorder %s29, 1
      %p194 = por %p192, %p193
      %p195 = scmp.ne.s32.totalorder %s186, %s187
      %p196 = scmp.eq.s32.totalorder %s29, 0
      %p197 = por %p195, %p196
      %p198 = scmp.ne.s32.totalorder %s186, %s187
      %p199 = scmp.eq.s32.totalorder %s30, 1
      %p200 = por %p198, %p199
      %p202 = scmp.ne.s32.totalorder %s187, %s201
      %p203 = scmp.eq.s32.totalorder %s30, 0
      %p204 = por %p202, %p203
      %s206 = sadd.s32 %s205, 1
      %p209 = scmp.eq.s32.totalorder %s24, 1
      %p210 = scmp.ne.s32.totalorder %s205, %s207
      %p211 = scmp.eq.s32.totalorder %s24, 0
      %p212 = por %p210, %p211
      %p213 = scmp.ne.s32.totalorder %s205, %s207
      %p214 = scmp.eq.s32.totalorder %s29, 1
      %p215 = por %p213, %p214
      %p216 = scmp.ne.s32.totalorder %s207, %s208
      %p217 = scmp.eq.s32.totalorder %s29, 0
      %p218 = por %p216, %p217
      %p219 = scmp.ne.s32.totalorder %s207, %s208
      %p220 = scmp.eq.s32.totalorder %s30, 1
      %p221 = por %p219, %p220
      %p223 = scmp.ne.s32.totalorder %s208, %s222
      %p224 = scmp.eq.s32.totalorder %s30, 0
      %p225 = por %p223, %p224
      %s227 = sadd.s32 %s226, 1
      %p230 = scmp.eq.s32.totalorder %s24, 1
      %p231 = scmp.ne.s32.totalorder %s226, %s228
      %p232 = scmp.eq.s32.totalorder %s24, 0
      %p233 = por %p231, %p232
      %p234 = scmp.ne.s32.totalorder %s226, %s228
      %p235 = scmp.eq.s32.totalorder %s29, 1
      %p236 = por %p234, %p235
      %p237 = scmp.ne.s32.totalorder %s228, %s229
      %p238 = scmp.eq.s32.totalorder %s29, 0
      %p239 = por %p237, %p238
      %p240 = scmp.ne.s32.totalorder %s228, %s229
      %p241 = scmp.eq.s32.totalorder %s30, 1
      %p242 = por %p240, %p241
      %p244 = scmp.ne.s32.totalorder %s229, %s243
      %p245 = scmp.eq.s32.totalorder %s30, 0
      %p246 = por %p244, %p245
      %s248 = sadd.s32 %s247, 1
      %p251 = scmp.eq.s32.totalorder %s24, 1
      %p252 = scmp.ne.s32.totalorder %s247, %s249
      %p253 = scmp.eq.s32.totalorder %s24, 0
      %p254 = por %p252, %p253
      %p255 = scmp.ne.s32.totalorder %s247, %s249
      %p256 = scmp.eq.s32.totalorder %s29, 1
      %p257 = por %p255, %p256
      %p258 = scmp.ne.s32.totalorder %s249, %s250
      %p259 = scmp.eq.s32.totalorder %s29, 0
      %p260 = por %p258, %p259
      %p261 = scmp.ne.s32.totalorder %s249, %s250
      %p262 = scmp.eq.s32.totalorder %s30, 1
      %p263 = por %p261, %p262
      %p265 = scmp.ne.s32.totalorder %s250, %s264
      %p266 = scmp.eq.s32.totalorder %s30, 0
      %p267 = por %p265, %p266
      %s269 = sadd.s32 %s268, 1
      %p272 = scmp.eq.s32.totalorder %s24, 1
      %p273 = scmp.ne.s32.totalorder %s268, %s270
      %p274 = scmp.eq.s32.totalorder %s24, 0
      %p275 = por %p273, %p274
      %p276 = scmp.ne.s32.totalorder %s268, %s270
      %p277 = scmp.eq.s32.totalorder %s29, 1
      %p278 = por %p276, %p277
      %p279 = scmp.ne.s32.totalorder %s270, %s271
      %p280 = scmp.eq.s32.totalorder %s29, 0
      %p281 = por %p279, %p280
      %p282 = scmp.ne.s32.totalorder %s270, %s271
      %p283 = scmp.eq.s32.totalorder %s30, 1
      %p284 = por %p282, %p283
      %p286 = scmp.ne.s32.totalorder %s271, %s285
      %p287 = scmp.eq.s32.totalorder %s30, 0
      %p288 = por %p286, %p287
      %s289 = ssub.s32 %s24, %s31
      %p290 = scmp.eq.s32.totalorder %s289, 0
      %s292 = sadd.s32 %s291, 1
      %s293 = scalar_select %p290, %s291, %s292
      %p296 = pneg %p290
      %p297 = scmp.eq.s32.totalorder %s24, 1
      %p298 = por %p296, %p297
      %p299 = scmp.ne.s32.totalorder %s291, %s294
      %p300 = scmp.eq.s32.totalorder %s24, 0
      %p301 = por %p299, %p300
      %p302 = scmp.ne.s32.totalorder %s291, %s294
      %p303 = scmp.eq.s32.totalorder %s29, 1
      %p304 = por %p302, %p303
      %p305 = scmp.ne.s32.totalorder %s294, %s295
      %p306 = scmp.eq.s32.totalorder %s29, 0
      %p307 = por %p305, %p306
      %p308 = scmp.ne.s32.totalorder %s294, %s295
      %p309 = scmp.eq.s32.totalorder %s30, 1
      %p310 = por %p308, %p309
      %p312 = scmp.ne.s32.totalorder %s295, %s311
      %p313 = scmp.eq.s32.totalorder %s30, 0
      %p314 = por %p312, %p313
      %p315 = scmp.le.s32.totalorder 1, %s24
      %p316 = scmp.lt.s32.totalorder %s24, 3
      %p317 = pnand %p315, %p316
      %p318 = pneg %p317
      // Predicated region
      $region9: #{tpu_custom_call.1} parent=5 // pred_check
        _
      $region10: #{tpu_custom_call.1} parent=5 // pred_check_branch
        %320 = sbr.rel (%p317) target = $region12
      $region11: #{tpu_custom_call.1} parent=5 // pred_region
        %s321 = ssub.s32 %s24, 1
        // Predicated region
        $region13: #{tpu_custom_call.1} parent=11 // pred_check
          %p322 = pneg %p71
        $region14: #{tpu_custom_call.1} parent=11 // pred_check_branch
          %324 = sbr.rel (%p322) target = $region16
        $region15: #{tpu_custom_call.1} parent=11 // pred_region
          _
        $region16: #{tpu_custom_call.1} parent=11 // pred_fallthru
          _
        // Predicated region
        $region17: #{tpu_custom_call.1} parent=11 // pred_check
          %p325 = pneg %p92
        $region18: #{tpu_custom_call.1} parent=11 // pred_check_branch
          %327 = sbr.rel (%p325) target = $region20
        $region19: #{tpu_custom_call.1} parent=11 // pred_region
          _
        $region20: #{tpu_custom_call.1} parent=11 // pred_fallthru
          _
        // Predicated region
        $region21: #{tpu_custom_call.1} parent=11 // pred_check
          %p328 = pneg %p113
        $region22: #{tpu_custom_call.1} parent=11 // pred_check_branch
          %330 = sbr.rel (%p328) target = $region24
        $region23: #{tpu_custom_call.1} parent=11 // pred_region
          %s332 = ssub.s32 4096, 4096
          %333 = vsyncadd [#allocation3], %s332
          %s334 = sshll.u32 [#allocation2], 4
          %s335 = int_to_ptr.vmem [resolvable:$true] %s334
          %340 = dma.hbm_to_vmem [thread:$0]  %s3, 4096, %s335, [#allocation3], 128, 128, 8
        $region24: #{tpu_custom_call.1} parent=11 // pred_fallthru
          _
        // Predicated region
        $region25: #{tpu_custom_call.1} parent=11 // pred_check
          %p341 = pneg %p134
        $region26: #{tpu_custom_call.1} parent=11 // pred_check_branch
          %343 = sbr.rel (%p341) target = $region28
        $region27: #{tpu_custom_call.1} parent=11 // pred_region
          _
        $region28: #{tpu_custom_call.1} parent=11 // pred_fallthru
          _
        // Predicated region
        $region29: #{tpu_custom_call.1} parent=11 // pred_check
          %p344 = pneg %p155
        $region30: #{tpu_custom_call.1} parent=11 // pred_check_branch
          %346 = sbr.rel (%p344) target = $region32
        $region31: #{tpu_custom_call.1} parent=11 // pred_region
          %s348 = ssub.s32 2048, 2048
          %349 = vsyncadd [#allocation6], %s348
          %s350 = sshll.u32 [#allocation5], 4
          %s351 = int_to_ptr.vmem [resolvable:$true] %s350
          %356 = dma.hbm_to_vmem [thread:$0]  %s5, 2048, %s351, [#allocation6], 64, 64, 4
        $region32: #{tpu_custom_call.1} parent=11 // pred_fallthru
          _
        // Predicated region
        $region33: #{tpu_custom_call.1} parent=11 // pred_check
          %p357 = pneg %p176
        $region34: #{tpu_custom_call.1} parent=11 // pred_check_branch
          %359 = sbr.rel (%p357) target = $region36
        $region35: #{tpu_custom_call.1} parent=11 // pred_region
          _
        $region36: #{tpu_custom_call.1} parent=11 // pred_fallthru
          _
        // Predicated region
        $region37: #{tpu_custom_call.1} parent=11 // pred_check
          %p360 = pneg %p197
        $region38: #{tpu_custom_call.1} parent=11 // pred_check_branch
          %362 = sbr.rel (%p360) target = $region40
        $region39: #{tpu_custom_call.1} parent=11 // pred_region
          %s364 = ssub.s32 2048, 2048
          %365 = vsyncadd [#allocation6], %s364
          %s366 = sshll.u32 [#allocation7], 4
          %s367 = int_to_ptr.vmem [resolvable:$true] %s366
          %372 = dma.hbm_to_vmem [thread:$0]  %s7, 2048, %s367, [#allocation6], 128, 128, 8
        $region40: #{tpu_custom_call.1} parent=11 // pred_fallthru
          _
        // Predicated region
        $region41: #{tpu_custom_call.1} parent=11 // pred_check
          %p373 = pneg %p218
        $region42: #{tpu_custom_call.1} parent=11 // pred_check_branch
          %375 = sbr.rel (%p373) target = $region44
        $region43: #{tpu_custom_call.1} parent=11 // pred_region
          %s377 = ssub.s32 4096, 4096
          %378 = vsyncadd [#allocation9], %s377
          %s379 = sshll.u32 [#allocation8], 4
          %s380 = int_to_ptr.vmem [resolvable:$true] %s379
          %385 = dma.hbm_to_vmem [thread:$0]  %s8, 4096, %s380, [#allocation9], 128, 128, 8
        $region44: #{tpu_custom_call.1} parent=11 // pred_fallthru
          _
        // Predicated region
        $region45: #{tpu_custom_call.1} parent=11 // pred_check
          %p386 = pneg %p239
        $region46: #{tpu_custom_call.1} parent=11 // pred_check_branch
          %388 = sbr.rel (%p386) target = $region48
        $region47: #{tpu_custom_call.1} parent=11 // pred_region
          _
        $region48: #{tpu_custom_call.1} parent=11 // pred_fallthru
          _
        // Predicated region
        $region49: #{tpu_custom_call.1} parent=11 // pred_check
          %p389 = pneg %p260
        $region50: #{tpu_custom_call.1} parent=11 // pred_check_branch
          %391 = sbr.rel (%p389) target = $region52
        $region51: #{tpu_custom_call.1} parent=11 // pred_region
          %s393 = ssub.s32 2048, 2048
          %394 = vsyncadd [#allocation9], %s393
          %s395 = sshll.u32 [#allocation10], 4
          %s396 = int_to_ptr.vmem [resolvable:$true] %s395
          %401 = dma.hbm_to_vmem [thread:$0]  %s10, 2048, %s396, [#allocation9], 64, 64, 4
        $region52: #{tpu_custom_call.1} parent=11 // pred_fallthru
          _
        // Predicated region
        $region53: #{tpu_custom_call.1} parent=11 // pred_check
          %p402 = pneg %p281
        $region54: #{tpu_custom_call.1} parent=11 // pred_check_branch
          %404 = sbr.rel (%p402) target = $region56
        $region55: #{tpu_custom_call.1} parent=11 // pred_region
          _
        $region56: #{tpu_custom_call.1} parent=11 // pred_fallthru
          _
      $region12: #{tpu_custom_call.1} parent=5 // pred_fallthru
        _
      %p405 = scmp.lt.s32.totalorder %s24, 2
      // Predicated region
      $region57: #{tpu_custom_call.1} parent=5 // pred_check
        %p406 = pneg %p405
      $region58: #{tpu_custom_call.1} parent=5 // pred_check_branch
        %408 = sbr.rel (%p406) target = $region60
      $region59: #{tpu_custom_call.1} parent=5 // pred_region
        // Predicated region
        $region61: #{tpu_custom_call.1} parent=59 // pred_check
          %p409 = pneg %p44
        $region62: #{tpu_custom_call.1} parent=59 // pred_check_branch
          %411 = sbr.rel (%p409) target = $region64
        $region63: #{tpu_custom_call.1} parent=59 // pred_region
          %s412 = smul.u32 4, %s24
          %p413 = scmp.lt.s32.totalorder %s412, 7
          %s414 = scalar_select %p413, %s412, 7
          %s415 = smul.addr %s414, 8
          %s416 = scalar_lea.vmem %s0, %s415
          %s417 = smul.u32 4, %s24
        $region64: #{tpu_custom_call.1} parent=59 // pred_fallthru
          _
      $region60: #{tpu_custom_call.1} parent=5 // pred_fallthru
        _
      %p418 = scmp.le.s32.totalorder 1, %s24
      %p419 = scmp.lt.s32.totalorder %s24, 3
      %p420 = pnand %p418, %p419
      %p421 = pneg %p420
      // Predicated region
      $region65: #{tpu_custom_call.1} parent=5 // pred_check
        _
      $region66: #{tpu_custom_call.1} parent=5 // pred_check_branch
        %423 = sbr.rel (%p420) target = $region68
      $region67: #{tpu_custom_call.1} parent=5 // pred_region
        %s424 = ssub.s32 %s24, 1
        // Predicated region
        $region69: #{tpu_custom_call.1} parent=67 // pred_check
          %p425 = pneg %p113
        $region70: #{tpu_custom_call.1} parent=67 // pred_check_branch
          %427 = sbr.rel (%p425) target = $region72
        $region71: #{tpu_custom_call.1} parent=67 // pred_region
          %428 = dma.done [#allocation3], 4096
        $region72: #{tpu_custom_call.1} parent=67 // pred_fallthru
          _
        // Predicated region
        $region73: #{tpu_custom_call.1} parent=67 // pred_check
          %p429 = pneg %p155
        $region74: #{tpu_custom_call.1} parent=67 // pred_check_branch
          %431 = sbr.rel (%p429) target = $region76
        $region75: #{tpu_custom_call.1} parent=67 // pred_region
          %432 = dma.done [#allocation6], 2048
        $region76: #{tpu_custom_call.1} parent=67 // pred_fallthru
          _
        // Predicated region
        $region77: #{tpu_custom_call.1} parent=67 // pred_check
          %p433 = pneg %p197
        $region78: #{tpu_custom_call.1} parent=67 // pred_check_branch
          %435 = sbr.rel (%p433) target = $region80
        $region79: #{tpu_custom_call.1} parent=67 // pred_region
          %436 = dma.done [#allocation6], 2048
        $region80: #{tpu_custom_call.1} parent=67 // pred_fallthru
          _
        // Predicated region
        $region81: #{tpu_custom_call.1} parent=67 // pred_check
          %p437 = pneg %p218
        $region82: #{tpu_custom_call.1} parent=67 // pred_check_branch
          %439 = sbr.rel (%p437) target = $region84
        $region83: #{tpu_custom_call.1} parent=67 // pred_region
          %440 = dma.done [#allocation9], 4096
        $region84: #{tpu_custom_call.1} parent=67 // pred_fallthru
          _
        // Predicated region
        $region85: #{tpu_custom_call.1} parent=67 // pred_check
          %p441 = pneg %p260
        $region86: #{tpu_custom_call.1} parent=67 // pred_check_branch
          %443 = sbr.rel (%p441) target = $region88
        $region87: #{tpu_custom_call.1} parent=67 // pred_region
          %444 = dma.done [#allocation9], 2048
        $region88: #{tpu_custom_call.1} parent=67 // pred_fallthru
          _
        %s445 = smul.u32 4, %s29
        %p446 = scmp.lt.s32.totalorder %s445, 7
        %s447 = scalar_select %p446, %s445, 7
        %s448 = smul.addr %s447, 8
        %s449 = scalar_lea.vmem %s0, %s448
        %p450 = pneg %p50
        %p451 = pneg %p47
        %p452 = pneg %p71
        %p453 = pneg %p68
        %p454 = pneg %p92
        %p455 = pneg %p89
        %p456 = pneg %p113
        %p457 = pneg %p110
        %p458 = pneg %p134
        %p459 = pneg %p131
        %p460 = pneg %p155
        %p461 = pneg %p152
        %p462 = pneg %p176
        %p463 = pneg %p173
        %p464 = pneg %p197
        %p465 = pneg %p194
        %p466 = pneg %p218
        %p467 = pneg %p215
        %p468 = pneg %p239
        %p469 = pneg %p236
        %p470 = pneg %p260
        %p471 = pneg %p257
        %p472 = pneg %p281
        %p473 = pneg %p278
        %p474 = pneg %p307
        %p475 = pneg %p304
        %s476 = sand.u32 %s294, 1
        %s477 = scalar_lea.sflag [#allocation4], %s476
        %s478 = sand.u32 %s294, 1
        %s479 = smul.addr %s478, 32
        %s480 = scalar_lea.vmem [#allocation11], %s479
        %s481 = smul.u32 4, %s29
        %p482 = scmp.lt.s32.totalorder %s481, 7
        %s483 = scalar_select %p482, %s481, 7
        %s484 = smul.addr %s483, 8
        %s485 = scalar_lea.vmem %s0, %s484
        %s486 = smul.u32 4, %s29
        %s487 = smul.u32 4, %s29
        %v489 = vld [vmem:[%s485] sm:$0xff]
        %v490 = vld [vmem:[%s485 + $0x8] sm:$0xff]
        %v491 = vld [vmem:[%s485 + $0x10] sm:$0xff]
        %v492 = vld [vmem:[%s485 + $0x18] sm:$0xff]
        %v493 = vpack.c.bf16 %v490, %v489
        %v494 = vpack.c.bf16 %v492, %v491
        %v495 = vld [vmem:[%s1] sm:$0xff]
        %v496 = vld [vmem:[%s1 + $0x8] sm:$0xff]
        %v497 = vld [vmem:[%s1 + $0x10] sm:$0xff]
        %v498 = vld [vmem:[%s1 + $0x18] sm:$0xff]
        %v499 = vld [vmem:[%s2] sm:$0xf]
        %v501 = vlaneseq
        %v502 = vshrl.u32 %v501, 7
        %v503 = vsub.s32 0, %v502
        %v504 = vrot.slane %v499, %v503
        %v505 = vlaneseq
        %v506 = vshrl.u32 %v505, 7
        %v507 = vsub.s32 1, %v506
        %v508 = vrot.slane %v499, %v507
        %v509 = vlaneseq
        %v510 = vshrl.u32 %v509, 7
        %v511 = vsub.s32 2, %v510
        %v512 = vrot.slane %v499, %v511
        %v513 = vlaneseq
        %v514 = vshrl.u32 %v513, 7
        %v515 = vsub.s32 3, %v514
        %v516 = vrot.slane %v499, %v515
        %v525 = vunpack.c.l.b16 %v495
        %v526 = vunpack.c.h.b16 %v495
        %v527 = vunpack.c.l.b16 %v496
        %v528 = vunpack.c.h.b16 %v496
        %v529 = vunpack.c.l.b16 %v497
        %v530 = vunpack.c.h.b16 %v497
        %v531 = vunpack.c.l.b16 %v498
        %v532 = vunpack.c.h.b16 %v498
        %v533 = vpack.c.b16 %v529, %v525
        %v534 = vpack.c.b16 %v530, %v526
        %v535 = vpack.c.b16 %v531, %v527
        %v536 = vpack.c.b16 %v532, %v528
        %vm541 = vcmask 130048
        %v543 = vsel %vm541, %v493, 0
        %v546 = vsel %vm541, %v494, 0
        %548 = vmatprep.subr.bf16.mxu0 0
        %549 = vmatpush1.bf16.msra.mxu0 0
        %550 = vmatprep.subr.bf16.mxu0 0
        %551 = vmatpush1.bf16.msra.mxu0 0
        %552 = vmatprep.subr.bf16.mxu0 0
        %553 = vmatpush1.bf16.msra.mxu0 0
        %554 = vmatprep.subr.bf16.mxu0 0
        %555 = vmatpush1.bf16.msra.mxu0 0
        %556 = vmatprep.subr.bf16.mxu0 0
        %557 = vmatpush1.bf16.msra.mxu0 0
        %558 = vmatprep.subr.bf16.mxu0 0
        %559 = vmatpush1.bf16.msra.mxu0 0
        %560 = vmatprep.subr.bf16.mxu0 0
        %561 = vmatpush1.bf16.msra.mxu0 0
        %562 = vmatprep.subr.bf16.mxu0 %v534
        %563 = vmatpush1.bf16.msra.mxu0 %v533
        %564 = vmatprep.subr.bf16.mxu0 0
        %565 = vmatpush2.bf16.msra.mxu0 0
        %566 = vmatprep.subr.bf16.mxu0 0
        %567 = vmatpush2.bf16.msra.mxu0 0
        %568 = vmatprep.subr.bf16.mxu0 0
        %569 = vmatpush2.bf16.msra.mxu0 0
        %570 = vmatprep.subr.bf16.mxu0 0
        %571 = vmatpush2.bf16.msra.mxu0 0
        %572 = vmatprep.subr.bf16.mxu0 0
        %573 = vmatpush2.bf16.msra.mxu0 0
        %574 = vmatprep.subr.bf16.mxu0 0
        %575 = vmatpush2.bf16.msra.mxu0 0
        %576 = vmatprep.subr.bf16.mxu0 0
        %577 = vmatpush2.bf16.msra.mxu0 0
        %578 = vmatprep.subr.bf16.mxu0 0
        %579 = vmatpush2.bf16.msra.mxu0 0
        %580 = vmatprep.mubr.bf16.mxu0 0
        %581 = vmatmul.mubr.bf16.gmra.mxu0 %v543
        %v582 = vpop.f32.mrf.mxu0
        %v583 = vadd.f32 %v504, %v582
        %v584 = vpop.f32.mrf.mxu0
        %v585 = vadd.f32 %v508, %v584
        %v586 = vpop.f32.mrf.mxu0
        %v587 = vadd.f32 %v504, %v586
        %v588 = vpop.f32.mrf.mxu0
        %v589 = vadd.f32 %v508, %v588
        %590 = vmatprep.mubr.bf16.mxu0 0
        %591 = vmatmul.mubr.bf16.gmra.mxu0 %v546
        %v592 = vpop.f32.mrf.mxu0
        %v593 = vadd.f32 %v504, %v592
        %v594 = vpop.f32.mrf.mxu0
        %v595 = vadd.f32 %v508, %v594
        %v596 = vpop.f32.mrf.mxu0
        %v597 = vadd.f32 %v504, %v596
        %v598 = vpop.f32.mrf.mxu0
        %v599 = vadd.f32 %v508, %v598
        %600 = vdwg.mxu0
        %601 = vmatprep.subr.bf16.mxu0 0
        %602 = vmatpush1.bf16.msra.mxu0 0
        %603 = vmatprep.subr.bf16.mxu0 0
        %604 = vmatpush1.bf16.msra.mxu0 0
        %605 = vmatprep.subr.bf16.mxu0 0
        %606 = vmatpush1.bf16.msra.mxu0 0
        %607 = vmatprep.subr.bf16.mxu0 0
        %608 = vmatpush1.bf16.msra.mxu0 0
        %609 = vmatprep.subr.bf16.mxu0 0
        %610 = vmatpush1.bf16.msra.mxu0 0
        %611 = vmatprep.subr.bf16.mxu0 0
        %612 = vmatpush1.bf16.msra.mxu0 0
        %613 = vmatprep.subr.bf16.mxu0 0
        %614 = vmatpush1.bf16.msra.mxu0 0
        %615 = vmatprep.subr.bf16.mxu0 %v536
        %616 = vmatpush1.bf16.msra.mxu0 %v535
        %617 = vmatprep.subr.bf16.mxu0 0
        %618 = vmatpush2.bf16.msra.mxu0 0
        %619 = vmatprep.subr.bf16.mxu0 0
        %620 = vmatpush2.bf16.msra.mxu0 0
        %621 = vmatprep.subr.bf16.mxu0 0
        %622 = vmatpush2.bf16.msra.mxu0 0
        %623 = vmatprep.subr.bf16.mxu0 0
        %624 = vmatpush2.bf16.msra.mxu0 0
        %625 = vmatprep.subr.bf16.mxu0 0
        %626 = vmatpush2.bf16.msra.mxu0 0
        %627 = vmatprep.subr.bf16.mxu0 0
        %628 = vmatpush2.bf16.msra.mxu0 0
        %629 = vmatprep.subr.bf16.mxu0 0
        %630 = vmatpush2.bf16.msra.mxu0 0
        %631 = vmatprep.subr.bf16.mxu0 0
        %632 = vmatpush2.bf16.msra.mxu0 0
        %633 = vmatprep.mubr.bf16.mxu0 0
        %634 = vmatmul.mubr.bf16.gmra.mxu0 %v543
        %v635 = vpop.f32.mrf.mxu0
        %v636 = vadd.f32 %v512, %v635
        %v637 = vpop.f32.mrf.mxu0
        %v638 = vadd.f32 %v516, %v637
        %v639 = vpop.f32.mrf.mxu0
        %v640 = vadd.f32 %v512, %v639
        %v641 = vpop.f32.mrf.mxu0
        %v642 = vadd.f32 %v516, %v641
        %643 = vmatprep.mubr.bf16.mxu0 0
        %644 = vmatmul.mubr.bf16.gmra.mxu0 %v546
        %v645 = vpop.f32.mrf.mxu0
        %v646 = vadd.f32 %v512, %v645
        %v647 = vpop.f32.mrf.mxu0
        %v648 = vadd.f32 %v516, %v647
        %v649 = vpop.f32.mrf.mxu0
        %v650 = vadd.f32 %v512, %v649
        %v651 = vpop.f32.mrf.mxu0
        %v652 = vadd.f32 %v516, %v651
        %653 = vdwg.mxu0
        %v654 = vmax.f32 %v583, 0.0
        %v655 = vmax.f32 %v585, 0.0
        %v656 = vmax.f32 %v587, 0.0
        %v657 = vmax.f32 %v589, 0.0
        %v658 = vmax.f32 %v593, 0.0
        %v659 = vmax.f32 %v595, 0.0
        %v660 = vmax.f32 %v597, 0.0
        %v661 = vmax.f32 %v599, 0.0
        %v662 = vpack.c.bf16 %v656, %v654
        %v663 = vpack.c.bf16 %v657, %v655
        %v664 = vpack.c.bf16 %v660, %v658
        %v665 = vpack.c.bf16 %v661, %v659
        %v666 = vld [vmem:[#allocation2] sm:$0xff]
        %v667 = vld [vmem:[#allocation2 + $0x8] sm:$0xff]
        %v668 = vld [vmem:[#allocation2 + $0x10] sm:$0xff]
        %v669 = vld [vmem:[#allocation2 + $0x18] sm:$0xff]
        %v670 = vld [vmem:[#allocation2 + $0x20] sm:$0xff]
        %v671 = vld [vmem:[#allocation2 + $0x28] sm:$0xff]
        %v672 = vld [vmem:[#allocation2 + $0x30] sm:$0xff]
        %v673 = vld [vmem:[#allocation2 + $0x38] sm:$0xff]
        %v674 = vld [vmem:[#allocation2 + $0x40] sm:$0xff]
        %v675 = vld [vmem:[#allocation2 + $0x48] sm:$0xff]
        %v676 = vld [vmem:[#allocation2 + $0x50] sm:$0xff]
        %v677 = vld [vmem:[#allocation2 + $0x58] sm:$0xff]
        %v678 = vld [vmem:[#allocation2 + $0x60] sm:$0xff]
        %v679 = vld [vmem:[#allocation2 + $0x68] sm:$0xff]
        %v680 = vld [vmem:[#allocation2 + $0x70] sm:$0xff]
        %v681 = vld [vmem:[#allocation2 + $0x78] sm:$0xff]
        %v682 = vld [vmem:[#allocation2 + $0x80] sm:$0xff]
        %v683 = vld [vmem:[#allocation2 + $0x88] sm:$0xff]
        %v684 = vld [vmem:[#allocation2 + $0x90] sm:$0xff]
        %v685 = vld [vmem:[#allocation2 + $0x98] sm:$0xff]
        %v686 = vld [vmem:[#allocation2 + $0xa0] sm:$0xff]
        %v687 = vld [vmem:[#allocation2 + $0xa8] sm:$0xff]
        %v688 = vld [vmem:[#allocation2 + $0xb0] sm:$0xff]
        %v689 = vld [vmem:[#allocation2 + $0xb8] sm:$0xff]
        %v690 = vld [vmem:[#allocation2 + $0xc0] sm:$0xff]
        %v691 = vld [vmem:[#allocation2 + $0xc8] sm:$0xff]
        %v692 = vld [vmem:[#allocation2 + $0xd0] sm:$0xff]
        %v693 = vld [vmem:[#allocation2 + $0xd8] sm:$0xff]
        %v694 = vld [vmem:[#allocation2 + $0xe0] sm:$0xff]
        %v695 = vld [vmem:[#allocation2 + $0xe8] sm:$0xff]
        %v696 = vld [vmem:[#allocation2 + $0xf0] sm:$0xff]
        %v697 = vld [vmem:[#allocation2 + $0xf8] sm:$0xff]
        %v698 = vld [vmem:[%s4] sm:$0x3]
        %v700 = vlaneseq
        %v701 = vshrl.u32 %v700, 7
        %v702 = vsub.s32 0, %v701
        %v703 = vrot.slane %v698, %v702
        %v704 = vlaneseq
        %v705 = vshrl.u32 %v704, 7
        %v706 = vsub.s32 1, %v705
        %v707 = vrot.slane %v698, %v706
        %v742 = vunpack.c.l.b16 %v666
        %v743 = vunpack.c.h.b16 %v666
        %v744 = vunpack.c.l.b16 %v667
        %v745 = vunpack.c.h.b16 %v667
        %v746 = vunpack.c.l.b16 %v668
        %v747 = vunpack.c.h.b16 %v668
        %v748 = vunpack.c.l.b16 %v669
        %v749 = vunpack.c.h.b16 %v669
        %v750 = vunpack.c.l.b16 %v670
        %v751 = vunpack.c.h.b16 %v670
        %v752 = vunpack.c.l.b16 %v671
        %v753 = vunpack.c.h.b16 %v671
        %v754 = vunpack.c.l.b16 %v672
        %v755 = vunpack.c.h.b16 %v672
        %v756 = vunpack.c.l.b16 %v673
        %v757 = vunpack.c.h.b16 %v673
        %v758 = vunpack.c.l.b16 %v674
        %v759 = vunpack.c.h.b16 %v674
        %v760 = vunpack.c.l.b16 %v675
        %v761 = vunpack.c.h.b16 %v675
        %v762 = vunpack.c.l.b16 %v676
        %v763 = vunpack.c.h.b16 %v676
        %v764 = vunpack.c.l.b16 %v677
        %v765 = vunpack.c.h.b16 %v677
        %v766 = vunpack.c.l.b16 %v678
        %v767 = vunpack.c.h.b16 %v678
        %v768 = vunpack.c.l.b16 %v679
        %v769 = vunpack.c.h.b16 %v679
        %v770 = vunpack.c.l.b16 %v680
        %v771 = vunpack.c.h.b16 %v680
        %v772 = vunpack.c.l.b16 %v681
        %v773 = vunpack.c.h.b16 %v681
        %v774 = vunpack.c.l.b16 %v682
        %v775 = vunpack.c.h.b16 %v682
        %v776 = vunpack.c.l.b16 %v683
        %v777 = vunpack.c.h.b16 %v683
        %v778 = vunpack.c.l.b16 %v684
        %v779 = vunpack.c.h.b16 %v684
        %v780 = vunpack.c.l.b16 %v685
        %v781 = vunpack.c.h.b16 %v685
        %v782 = vunpack.c.l.b16 %v686
        %v783 = vunpack.c.h.b16 %v686
        %v784 = vunpack.c.l.b16 %v687
        %v785 = vunpack.c.h.b16 %v687
        %v786 = vunpack.c.l.b16 %v688
        %v787 = vunpack.c.h.b16 %v688
        %v788 = vunpack.c.l.b16 %v689
        %v789 = vunpack.c.h.b16 %v689
        %v790 = vunpack.c.l.b16 %v690
        %v791 = vunpack.c.h.b16 %v690
        %v792 = vunpack.c.l.b16 %v691
        %v793 = vunpack.c.h.b16 %v691
        %v794 = vunpack.c.l.b16 %v692
        %v795 = vunpack.c.h.b16 %v692
        %v796 = vunpack.c.l.b16 %v693
        %v797 = vunpack.c.h.b16 %v693
        %v798 = vunpack.c.l.b16 %v694
        %v799 = vunpack.c.h.b16 %v694
        %v800 = vunpack.c.l.b16 %v695
        %v801 = vunpack.c.h.b16 %v695
        %v802 = vunpack.c.l.b16 %v696
        %v803 = vunpack.c.h.b16 %v696
        %v804 = vunpack.c.l.b16 %v697
        %v805 = vunpack.c.h.b16 %v697
        %v806 = vpack.c.b16 %v744, %v742
        %v807 = vpack.c.b16 %v745, %v743
        %v808 = vpack.c.b16 %v748, %v746
        %v809 = vpack.c.b16 %v749, %v747
        %v810 = vpack.c.b16 %v752, %v750
        %v811 = vpack.c.b16 %v753, %v751
        %v812 = vpack.c.b16 %v756, %v754
        %v813 = vpack.c.b16 %v757, %v755
        %v814 = vpack.c.b16 %v760, %v758
        %v815 = vpack.c.b16 %v761, %v759
        %v816 = vpack.c.b16 %v764, %v762
        %v817 = vpack.c.b16 %v765, %v763
        %v818 = vpack.c.b16 %v768, %v766
        %v819 = vpack.c.b16 %v769, %v767
        %v820 = vpack.c.b16 %v772, %v770
        %v821 = vpack.c.b16 %v773, %v771
        %v822 = vpack.c.b16 %v776, %v774
        %v823 = vpack.c.b16 %v777, %v775
        %v824 = vpack.c.b16 %v780, %v778
        %v825 = vpack.c.b16 %v781, %v779
        %v826 = vpack.c.b16 %v784, %v782
        %v827 = vpack.c.b16 %v785, %v783
        %v828 = vpack.c.b16 %v788, %v786
        %v829 = vpack.c.b16 %v789, %v787
        %v830 = vpack.c.b16 %v792, %v790
        %v831 = vpack.c.b16 %v793, %v791
        %v832 = vpack.c.b16 %v796, %v794
        %v833 = vpack.c.b16 %v797, %v795
        %v834 = vpack.c.b16 %v800, %v798
        %v835 = vpack.c.b16 %v801, %v799
        %v836 = vpack.c.b16 %v804, %v802
        %v837 = vpack.c.b16 %v805, %v803
        %870 = vmatprep.subr.bf16.mxu0 %v821
        %871 = vmatpush1.bf16.msra.mxu0 %v820
        %872 = vmatprep.subr.bf16.mxu0 %v819
        %873 = vmatpush1.bf16.msra.mxu0 %v818
        %874 = vmatprep.subr.bf16.mxu0 %v817
        %875 = vmatpush1.bf16.msra.mxu0 %v816
        %876 = vmatprep.subr.bf16.mxu0 %v815
        %877 = vmatpush1.bf16.msra.mxu0 %v814
        %878 = vmatprep.subr.bf16.mxu0 %v813
        %879 = vmatpush1.bf16.msra.mxu0 %v812
        %880 = vmatprep.subr.bf16.mxu0 %v811
        %881 = vmatpush1.bf16.msra.mxu0 %v810
        %882 = vmatprep.subr.bf16.mxu0 %v809
        %883 = vmatpush1.bf16.msra.mxu0 %v808
        %884 = vmatprep.subr.bf16.mxu0 %v807
        %885 = vmatpush1.bf16.msra.mxu0 %v806
        %886 = vmatprep.subr.bf16.mxu0 %v837
        %887 = vmatpush2.bf16.msra.mxu0 %v836
        %888 = vmatprep.subr.bf16.mxu0 %v835
        %889 = vmatpush2.bf16.msra.mxu0 %v834
        %890 = vmatprep.subr.bf16.mxu0 %v833
        %891 = vmatpush2.bf16.msra.mxu0 %v832
        %892 = vmatprep.subr.bf16.mxu0 %v831
        %893 = vmatpush2.bf16.msra.mxu0 %v830
        %894 = vmatprep.subr.bf16.mxu0 %v829
        %895 = vmatpush2.bf16.msra.mxu0 %v828
        %896 = vmatprep.subr.bf16.mxu0 %v827
        %897 = vmatpush2.bf16.msra.mxu0 %v826
        %898 = vmatprep.subr.bf16.mxu0 %v825
        %899 = vmatpush2.bf16.msra.mxu0 %v824
        %900 = vmatprep.subr.bf16.mxu0 %v823
        %901 = vmatpush2.bf16.msra.mxu0 %v822
        %902 = vmatprep.mubr.bf16.mxu0 %v663
        %903 = vmatmul.mubr.bf16.gmra.mxu0 %v662
        %v904 = vpop.f32.mrf.mxu0
        %v905 = vadd.f32 %v703, %v904
        %v906 = vpop.f32.mrf.mxu0
        %v907 = vadd.f32 %v707, %v906
        %v908 = vpop.f32.mrf.mxu0
        %v909 = vadd.f32 %v703, %v908
        %v910 = vpop.f32.mrf.mxu0
        %v911 = vadd.f32 %v707, %v910
        %912 = vmatprep.mubr.bf16.mxu0 %v665
        %913 = vmatmul.mubr.bf16.gmra.mxu0 %v664
        %v914 = vpop.f32.mrf.mxu0
        %v915 = vadd.f32 %v703, %v914
        %v916 = vpop.f32.mrf.mxu0
        %v917 = vadd.f32 %v707, %v916
        %v918 = vpop.f32.mrf.mxu0
        %v919 = vadd.f32 %v703, %v918
        %v920 = vpop.f32.mrf.mxu0
        %v921 = vadd.f32 %v707, %v920
        %922 = vdwg.mxu0
        %v923 = vmax.f32 %v905, 0.0
        %v924 = vmax.f32 %v907, 0.0
        %v925 = vmax.f32 %v909, 0.0
        %v926 = vmax.f32 %v911, 0.0
        %v927 = vmax.f32 %v915, 0.0
        %v928 = vmax.f32 %v917, 0.0
        %v929 = vmax.f32 %v919, 0.0
        %v930 = vmax.f32 %v921, 0.0
        %v931 = vpack.c.bf16 %v925, %v923
        %v932 = vpack.c.bf16 %v926, %v924
        %v933 = vpack.c.bf16 %v929, %v927
        %v934 = vpack.c.bf16 %v930, %v928
        %v935 = vld [vmem:[#allocation5] sm:$0xf]
        %v936 = vld [vmem:[#allocation5 + $0x4] sm:$0xf]
        %v937 = vld [vmem:[#allocation5 + $0x8] sm:$0xf]
        %v938 = vld [vmem:[#allocation5 + $0xc] sm:$0xf]
        %v939 = vld [vmem:[#allocation5 + $0x10] sm:$0xf]
        %v940 = vld [vmem:[#allocation5 + $0x14] sm:$0xf]
        %v941 = vld [vmem:[#allocation5 + $0x18] sm:$0xf]
        %v942 = vld [vmem:[#allocation5 + $0x1c] sm:$0xf]
        %v943 = vld [vmem:[#allocation5 + $0x20] sm:$0xf]
        %v944 = vld [vmem:[#allocation5 + $0x24] sm:$0xf]
        %v945 = vld [vmem:[#allocation5 + $0x28] sm:$0xf]
        %v946 = vld [vmem:[#allocation5 + $0x2c] sm:$0xf]
        %v947 = vld [vmem:[#allocation5 + $0x30] sm:$0xf]
        %v948 = vld [vmem:[#allocation5 + $0x34] sm:$0xf]
        %v949 = vld [vmem:[#allocation5 + $0x38] sm:$0xf]
        %v950 = vld [vmem:[#allocation5 + $0x3c] sm:$0xf]
        %v951 = vld [vmem:[#allocation5 + $0x40] sm:$0xf]
        %v952 = vld [vmem:[#allocation5 + $0x44] sm:$0xf]
        %v953 = vld [vmem:[#allocation5 + $0x48] sm:$0xf]
        %v954 = vld [vmem:[#allocation5 + $0x4c] sm:$0xf]
        %v955 = vld [vmem:[#allocation5 + $0x50] sm:$0xf]
        %v956 = vld [vmem:[#allocation5 + $0x54] sm:$0xf]
        %v957 = vld [vmem:[#allocation5 + $0x58] sm:$0xf]
        %v958 = vld [vmem:[#allocation5 + $0x5c] sm:$0xf]
        %v959 = vld [vmem:[#allocation5 + $0x60] sm:$0xf]
        %v960 = vld [vmem:[#allocation5 + $0x64] sm:$0xf]
        %v961 = vld [vmem:[#allocation5 + $0x68] sm:$0xf]
        %v962 = vld [vmem:[#allocation5 + $0x6c] sm:$0xf]
        %v963 = vld [vmem:[#allocation5 + $0x70] sm:$0xf]
        %v964 = vld [vmem:[#allocation5 + $0x74] sm:$0xf]
        %v965 = vld [vmem:[#allocation5 + $0x78] sm:$0xf]
        %v966 = vld [vmem:[#allocation5 + $0x7c] sm:$0xf]
        %v967 = vld [vmem:[%s6] sm:$0x1]
        %v969 = vlaneseq
        %v970 = vshrl.u32 %v969, 7
        %v971 = vsub.s32 0, %v970
        %v972 = vrot.slane %v967, %v971
        %v1006 = vunpack.c.l.b16 %v935
        %v1007 = vunpack.c.l.b16 %v936
        %v1008 = vunpack.c.l.b16 %v937
        %v1009 = vunpack.c.l.b16 %v938
        %v1010 = vunpack.c.l.b16 %v939
        %v1011 = vunpack.c.l.b16 %v940
        %v1012 = vunpack.c.l.b16 %v941
        %v1013 = vunpack.c.l.b16 %v942
        %v1014 = vunpack.c.l.b16 %v943
        %v1015 = vunpack.c.l.b16 %v944
        %v1016 = vunpack.c.l.b16 %v945
        %v1017 = vunpack.c.l.b16 %v946
        %v1018 = vunpack.c.l.b16 %v947
        %v1019 = vunpack.c.l.b16 %v948
        %v1020 = vunpack.c.l.b16 %v949
        %v1021 = vunpack.c.l.b16 %v950
        %v1022 = vunpack.c.l.b16 %v951
        %v1023 = vunpack.c.l.b16 %v952
        %v1024 = vunpack.c.l.b16 %v953
        %v1025 = vunpack.c.l.b16 %v954
        %v1026 = vunpack.c.l.b16 %v955
        %v1027 = vunpack.c.l.b16 %v956
        %v1028 = vunpack.c.l.b16 %v957
        %v1029 = vunpack.c.l.b16 %v958
        %v1030 = vunpack.c.l.b16 %v959
        %v1031 = vunpack.c.l.b16 %v960
        %v1032 = vunpack.c.l.b16 %v961
        %v1033 = vunpack.c.l.b16 %v962
        %v1034 = vunpack.c.l.b16 %v963
        %v1035 = vunpack.c.l.b16 %v964
        %v1036 = vunpack.c.l.b16 %v965
        %v1037 = vunpack.c.l.b16 %v966
        %v1038 = vpack.c.b16 %v1007, %v1006
        %v1039 = vpack.c.b16 %v1009, %v1008
        %v1040 = vpack.c.b16 %v1011, %v1010
        %v1041 = vpack.c.b16 %v1013, %v1012
        %v1042 = vpack.c.b16 %v1015, %v1014
        %v1043 = vpack.c.b16 %v1017, %v1016
        %v1044 = vpack.c.b16 %v1019, %v1018
        %v1045 = vpack.c.b16 %v1021, %v1020
        %v1046 = vpack.c.b16 %v1023, %v1022
        %v1047 = vpack.c.b16 %v1025, %v1024
        %v1048 = vpack.c.b16 %v1027, %v1026
        %v1049 = vpack.c.b16 %v1029, %v1028
        %v1050 = vpack.c.b16 %v1031, %v1030
        %v1051 = vpack.c.b16 %v1033, %v1032
        %v1052 = vpack.c.b16 %v1035, %v1034
        %v1053 = vpack.c.b16 %v1037, %v1036
        %1070 = vmatprep.subr.bf16.mxu0 0
        %1071 = vmatpush1.bf16.msra.mxu0 %v1045
        %1072 = vmatprep.subr.bf16.mxu0 0
        %1073 = vmatpush1.bf16.msra.mxu0 %v1044
        %1074 = vmatprep.subr.bf16.mxu0 0
        %1075 = vmatpush1.bf16.msra.mxu0 %v1043
        %1076 = vmatprep.subr.bf16.mxu0 0
        %1077 = vmatpush1.bf16.msra.mxu0 %v1042
        %1078 = vmatprep.subr.bf16.mxu0 0
        %1079 = vmatpush1.bf16.msra.mxu0 %v1041
        %1080 = vmatprep.subr.bf16.mxu0 0
        %1081 = vmatpush1.bf16.msra.mxu0 %v1040
        %1082 = vmatprep.subr.bf16.mxu0 0
        %1083 = vmatpush1.bf16.msra.mxu0 %v1039
        %1084 = vmatprep.subr.bf16.mxu0 0
        %1085 = vmatpush1.bf16.msra.mxu0 %v1038
        %1086 = vmatprep.subr.bf16.mxu0 0
        %1087 = vmatpush2.bf16.msra.mxu0 %v1053
        %1088 = vmatprep.subr.bf16.mxu0 0
        %1089 = vmatpush2.bf16.msra.mxu0 %v1052
        %1090 = vmatprep.subr.bf16.mxu0 0
        %1091 = vmatpush2.bf16.msra.mxu0 %v1051
        %1092 = vmatprep.subr.bf16.mxu0 0
        %1093 = vmatpush2.bf16.msra.mxu0 %v1050
        %1094 = vmatprep.subr.bf16.mxu0 0
        %1095 = vmatpush2.bf16.msra.mxu0 %v1049
        %1096 = vmatprep.subr.bf16.mxu0 0
        %1097 = vmatpush2.bf16.msra.mxu0 %v1048
        %1098 = vmatprep.subr.bf16.mxu0 0
        %1099 = vmatpush2.bf16.msra.mxu0 %v1047
        %1100 = vmatprep.subr.bf16.mxu0 0
        %1101 = vmatpush2.bf16.msra.mxu0 %v1046
        %1102 = vmatprep.mubr.bf16.mxu0 %v932
        %1103 = vmatmul.mubr.bf16.gmra.mxu0 %v931
        %v1104 = vpop.f32.mrf.mxu0
        %v1105 = vadd.f32 %v972, %v1104
        %v1106 = vpop.f32.mrf.mxu0
        %v1107 = vpop.f32.mrf.mxu0
        %v1108 = vadd.f32 %v972, %v1107
        %v1109 = vpop.f32.mrf.mxu0
        %1110 = vmatprep.mubr.bf16.mxu0 %v934
        %1111 = vmatmul.mubr.bf16.gmra.mxu0 %v933
        %v1112 = vpop.f32.mrf.mxu0
        %v1113 = vadd.f32 %v972, %v1112
        %v1114 = vpop.f32.mrf.mxu0
        %v1115 = vpop.f32.mrf.mxu0
        %v1116 = vadd.f32 %v972, %v1115
        %v1117 = vpop.f32.mrf.mxu0
        %1118 = vdwg.mxu0
        %v1119 = vtanh.pop %v1105
        %v1120 = vtanh.pop %v1108
        %v1121 = vtanh.pop %v1113
        %v1122 = vtanh.pop %v1116
        %v1123 = vpack.c.bf16 %v1120, %v1119
        %v1124 = vpack.c.bf16 %v1122, %v1121
        %v1125 = vld [vmem:[#allocation7] sm:$0xff]
        %v1126 = vld [vmem:[#allocation7 + $0x8] sm:$0xff]
        %v1127 = vld [vmem:[#allocation7 + $0x10] sm:$0xff]
        %v1128 = vld [vmem:[#allocation7 + $0x18] sm:$0xff]
        %v1129 = vld [vmem:[#allocation7 + $0x20] sm:$0xff]
        %v1130 = vld [vmem:[#allocation7 + $0x28] sm:$0xff]
        %v1131 = vld [vmem:[#allocation7 + $0x30] sm:$0xff]
        %v1132 = vld [vmem:[#allocation7 + $0x38] sm:$0xff]
        %v1133 = vld [vmem:[#allocation7 + $0x40] sm:$0xff]
        %v1134 = vld [vmem:[#allocation7 + $0x48] sm:$0xff]
        %v1135 = vld [vmem:[#allocation7 + $0x50] sm:$0xff]
        %v1136 = vld [vmem:[#allocation7 + $0x58] sm:$0xff]
        %v1137 = vld [vmem:[#allocation7 + $0x60] sm:$0xff]
        %v1138 = vld [vmem:[#allocation7 + $0x68] sm:$0xff]
        %v1139 = vld [vmem:[#allocation7 + $0x70] sm:$0xff]
        %v1140 = vld [vmem:[#allocation7 + $0x78] sm:$0xff]
        %v1157 = vunpack.c.l.b16 %v1125
        %v1158 = vunpack.c.h.b16 %v1125
        %v1159 = vunpack.c.l.b16 %v1126
        %v1160 = vunpack.c.h.b16 %v1126
        %v1161 = vunpack.c.l.b16 %v1127
        %v1162 = vunpack.c.h.b16 %v1127
        %v1163 = vunpack.c.l.b16 %v1128
        %v1164 = vunpack.c.h.b16 %v1128
        %v1165 = vunpack.c.l.b16 %v1129
        %v1166 = vunpack.c.h.b16 %v1129
        %v1167 = vunpack.c.l.b16 %v1130
        %v1168 = vunpack.c.h.b16 %v1130
        %v1169 = vunpack.c.l.b16 %v1131
        %v1170 = vunpack.c.h.b16 %v1131
        %v1171 = vunpack.c.l.b16 %v1132
        %v1172 = vunpack.c.h.b16 %v1132
        %v1173 = vunpack.c.l.b16 %v1133
        %v1174 = vunpack.c.h.b16 %v1133
        %v1175 = vunpack.c.l.b16 %v1134
        %v1176 = vunpack.c.h.b16 %v1134
        %v1177 = vunpack.c.l.b16 %v1135
        %v1178 = vunpack.c.h.b16 %v1135
        %v1179 = vunpack.c.l.b16 %v1136
        %v1180 = vunpack.c.h.b16 %v1136
        %v1181 = vunpack.c.l.b16 %v1137
        %v1182 = vunpack.c.h.b16 %v1137
        %v1183 = vunpack.c.l.b16 %v1138
        %v1184 = vunpack.c.h.b16 %v1138
        %v1185 = vunpack.c.l.b16 %v1139
        %v1186 = vunpack.c.h.b16 %v1139
        %v1187 = vunpack.c.l.b16 %v1140
        %v1188 = vunpack.c.h.b16 %v1140
        %v1189 = vpack.c.b16 %v1159, %v1157
        %v1190 = vpack.c.b16 %v1160, %v1158
        %v1191 = vpack.c.b16 %v1163, %v1161
        %v1192 = vpack.c.b16 %v1164, %v1162
        %v1193 = vpack.c.b16 %v1167, %v1165
        %v1194 = vpack.c.b16 %v1168, %v1166
        %v1195 = vpack.c.b16 %v1171, %v1169
        %v1196 = vpack.c.b16 %v1172, %v1170
        %v1197 = vpack.c.b16 %v1175, %v1173
        %v1198 = vpack.c.b16 %v1176, %v1174
        %v1199 = vpack.c.b16 %v1179, %v1177
        %v1200 = vpack.c.b16 %v1180, %v1178
        %v1201 = vpack.c.b16 %v1183, %v1181
        %v1202 = vpack.c.b16 %v1184, %v1182
        %v1203 = vpack.c.b16 %v1187, %v1185
        %v1204 = vpack.c.b16 %v1188, %v1186
        %1221 = vmatprep.subr.bf16.mxu0 %v1204
        %1222 = vmatpush1.bf16.msra.mxu0 %v1203
        %1223 = vmatprep.subr.bf16.mxu0 %v1202
        %1224 = vmatpush1.bf16.msra.mxu0 %v1201
        %1225 = vmatprep.subr.bf16.mxu0 %v1200
        %1226 = vmatpush1.bf16.msra.mxu0 %v1199
        %1227 = vmatprep.subr.bf16.mxu0 %v1198
        %1228 = vmatpush1.bf16.msra.mxu0 %v1197
        %1229 = vmatprep.subr.bf16.mxu0 %v1196
        %1230 = vmatpush1.bf16.msra.mxu0 %v1195
        %1231 = vmatprep.subr.bf16.mxu0 %v1194
        %1232 = vmatpush1.bf16.msra.mxu0 %v1193
        %1233 = vmatprep.subr.bf16.mxu0 %v1192
        %1234 = vmatpush1.bf16.msra.mxu0 %v1191
        %1235 = vmatprep.subr.bf16.mxu0 %v1190
        %1236 = vmatpush1.bf16.msra.mxu0 %v1189
        %1237 = vmatprep.subr.bf16.mxu0 0
        %1238 = vmatpush2.bf16.msra.mxu0 0
        %1239 = vmatprep.subr.bf16.mxu0 0
        %1240 = vmatpush2.bf16.msra.mxu0 0
        %1241 = vmatprep.subr.bf16.mxu0 0
        %1242 = vmatpush2.bf16.msra.mxu0 0
        %1243 = vmatprep.subr.bf16.mxu0 0
        %1244 = vmatpush2.bf16.msra.mxu0 0
        %1245 = vmatprep.subr.bf16.mxu0 0
        %1246 = vmatpush2.bf16.msra.mxu0 0
        %1247 = vmatprep.subr.bf16.mxu0 0
        %1248 = vmatpush2.bf16.msra.mxu0 0
        %1249 = vmatprep.subr.bf16.mxu0 0
        %1250 = vmatpush2.bf16.msra.mxu0 0
        %1251 = vmatprep.subr.bf16.mxu0 0
        %1252 = vmatpush2.bf16.msra.mxu0 0
        %1253 = vmatprep.mubr.bf16.mxu0 0
        %1254 = vmatmul.mubr.bf16.gmra.mxu0 %v1123
        %v1255 = vpop.f32.mrf.mxu0
        %v1256 = vadd.f32 0.0, %v1255
        %v1257 = vpop.f32.mrf.mxu0
        %v1258 = vadd.f32 0.0, %v1257
        %v1259 = vpop.f32.mrf.mxu0
        %v1260 = vadd.f32 0.0, %v1259
        %v1261 = vpop.f32.mrf.mxu0
        %v1262 = vadd.f32 0.0, %v1261
        %1263 = vmatprep.mubr.bf16.mxu0 0
        %1264 = vmatmul.mubr.bf16.gmra.mxu0 %v1124
        %v1265 = vpop.f32.mrf.mxu0
        %v1266 = vadd.f32 0.0, %v1265
        %v1267 = vpop.f32.mrf.mxu0
        %v1268 = vadd.f32 0.0, %v1267
        %v1269 = vpop.f32.mrf.mxu0
        %v1270 = vadd.f32 0.0, %v1269
        %v1271 = vpop.f32.mrf.mxu0
        %v1272 = vadd.f32 0.0, %v1271
        %1273 = vdwg.mxu0
        %v1274 = vadd.f32 %v636, %v1256
        %v1275 = vadd.f32 %v638, %v1258
        %v1276 = vadd.f32 %v640, %v1260
        %v1277 = vadd.f32 %v642, %v1262
        %v1278 = vadd.f32 %v646, %v1266
        %v1279 = vadd.f32 %v648, %v1268
        %v1280 = vadd.f32 %v650, %v1270
        %v1281 = vadd.f32 %v652, %v1272
        %v1282 = vmax.f32 %v1274, 0.0
        %v1283 = vmax.f32 %v1275, 0.0
        %v1284 = vmax.f32 %v1276, 0.0
        %v1285 = vmax.f32 %v1277, 0.0
        %v1286 = vmax.f32 %v1278, 0.0
        %v1287 = vmax.f32 %v1279, 0.0
        %v1288 = vmax.f32 %v1280, 0.0
        %v1289 = vmax.f32 %v1281, 0.0
        %v1290 = vpack.c.bf16 %v1284, %v1282
        %v1291 = vpack.c.bf16 %v1285, %v1283
        %v1292 = vpack.c.bf16 %v1288, %v1286
        %v1293 = vpack.c.bf16 %v1289, %v1287
        %v1294 = vld [vmem:[#allocation8] sm:$0xff]
        %v1295 = vld [vmem:[#allocation8 + $0x8] sm:$0xff]
        %v1296 = vld [vmem:[#allocation8 + $0x10] sm:$0xff]
        %v1297 = vld [vmem:[#allocation8 + $0x18] sm:$0xff]
        %v1298 = vld [vmem:[#allocation8 + $0x20] sm:$0xff]
        %v1299 = vld [vmem:[#allocation8 + $0x28] sm:$0xff]
        %v1300 = vld [vmem:[#allocation8 + $0x30] sm:$0xff]
        %v1301 = vld [vmem:[#allocation8 + $0x38] sm:$0xff]
        %v1302 = vld [vmem:[#allocation8 + $0x40] sm:$0xff]
        %v1303 = vld [vmem:[#allocation8 + $0x48] sm:$0xff]
        %v1304 = vld [vmem:[#allocation8 + $0x50] sm:$0xff]
        %v1305 = vld [vmem:[#allocation8 + $0x58] sm:$0xff]
        %v1306 = vld [vmem:[#allocation8 + $0x60] sm:$0xff]
        %v1307 = vld [vmem:[#allocation8 + $0x68] sm:$0xff]
        %v1308 = vld [vmem:[#allocation8 + $0x70] sm:$0xff]
        %v1309 = vld [vmem:[#allocation8 + $0x78] sm:$0xff]
        %v1310 = vld [vmem:[#allocation8 + $0x80] sm:$0xff]
        %v1311 = vld [vmem:[#allocation8 + $0x88] sm:$0xff]
        %v1312 = vld [vmem:[#allocation8 + $0x90] sm:$0xff]
        %v1313 = vld [vmem:[#allocation8 + $0x98] sm:$0xff]
        %v1314 = vld [vmem:[#allocation8 + $0xa0] sm:$0xff]
        %v1315 = vld [vmem:[#allocation8 + $0xa8] sm:$0xff]
        %v1316 = vld [vmem:[#allocation8 + $0xb0] sm:$0xff]
        %v1317 = vld [vmem:[#allocation8 + $0xb8] sm:$0xff]
        %v1318 = vld [vmem:[#allocation8 + $0xc0] sm:$0xff]
        %v1319 = vld [vmem:[#allocation8 + $0xc8] sm:$0xff]
        %v1320 = vld [vmem:[#allocation8 + $0xd0] sm:$0xff]
        %v1321 = vld [vmem:[#allocation8 + $0xd8] sm:$0xff]
        %v1322 = vld [vmem:[#allocation8 + $0xe0] sm:$0xff]
        %v1323 = vld [vmem:[#allocation8 + $0xe8] sm:$0xff]
        %v1324 = vld [vmem:[#allocation8 + $0xf0] sm:$0xff]
        %v1325 = vld [vmem:[#allocation8 + $0xf8] sm:$0xff]
        %v1326 = vld [vmem:[%s9] sm:$0x3]
        %v1328 = vlaneseq
        %v1329 = vshrl.u32 %v1328, 7
        %v1330 = vsub.s32 0, %v1329
        %v1331 = vrot.slane %v1326, %v1330
        %v1332 = vlaneseq
        %v1333 = vshrl.u32 %v1332, 7
        %v1334 = vsub.s32 1, %v1333
        %v1335 = vrot.slane %v1326, %v1334
        %v1370 = vunpack.c.l.b16 %v1294
        %v1371 = vunpack.c.h.b16 %v1294
        %v1372 = vunpack.c.l.b16 %v1295
        %v1373 = vunpack.c.h.b16 %v1295
        %v1374 = vunpack.c.l.b16 %v1296
        %v1375 = vunpack.c.h.b16 %v1296
        %v1376 = vunpack.c.l.b16 %v1297
        %v1377 = vunpack.c.h.b16 %v1297
        %v1378 = vunpack.c.l.b16 %v1298
        %v1379 = vunpack.c.h.b16 %v1298
        %v1380 = vunpack.c.l.b16 %v1299
        %v1381 = vunpack.c.h.b16 %v1299
        %v1382 = vunpack.c.l.b16 %v1300
        %v1383 = vunpack.c.h.b16 %v1300
        %v1384 = vunpack.c.l.b16 %v1301
        %v1385 = vunpack.c.h.b16 %v1301
        %v1386 = vunpack.c.l.b16 %v1302
        %v1387 = vunpack.c.h.b16 %v1302
        %v1388 = vunpack.c.l.b16 %v1303
        %v1389 = vunpack.c.h.b16 %v1303
        %v1390 = vunpack.c.l.b16 %v1304
        %v1391 = vunpack.c.h.b16 %v1304
        %v1392 = vunpack.c.l.b16 %v1305
        %v1393 = vunpack.c.h.b16 %v1305
        %v1394 = vunpack.c.l.b16 %v1306
        %v1395 = vunpack.c.h.b16 %v1306
        %v1396 = vunpack.c.l.b16 %v1307
        %v1397 = vunpack.c.h.b16 %v1307
        %v1398 = vunpack.c.l.b16 %v1308
        %v1399 = vunpack.c.h.b16 %v1308
        %v1400 = vunpack.c.l.b16 %v1309
        %v1401 = vunpack.c.h.b16 %v1309
        %v1402 = vunpack.c.l.b16 %v1310
        %v1403 = vunpack.c.h.b16 %v1310
        %v1404 = vunpack.c.l.b16 %v1311
        %v1405 = vunpack.c.h.b16 %v1311
        %v1406 = vunpack.c.l.b16 %v1312
        %v1407 = vunpack.c.h.b16 %v1312
        %v1408 = vunpack.c.l.b16 %v1313
        %v1409 = vunpack.c.h.b16 %v1313
        %v1410 = vunpack.c.l.b16 %v1314
        %v1411 = vunpack.c.h.b16 %v1314
        %v1412 = vunpack.c.l.b16 %v1315
        %v1413 = vunpack.c.h.b16 %v1315
        %v1414 = vunpack.c.l.b16 %v1316
        %v1415 = vunpack.c.h.b16 %v1316
        %v1416 = vunpack.c.l.b16 %v1317
        %v1417 = vunpack.c.h.b16 %v1317
        %v1418 = vunpack.c.l.b16 %v1318
        %v1419 = vunpack.c.h.b16 %v1318
        %v1420 = vunpack.c.l.b16 %v1319
        %v1421 = vunpack.c.h.b16 %v1319
        %v1422 = vunpack.c.l.b16 %v1320
        %v1423 = vunpack.c.h.b16 %v1320
        %v1424 = vunpack.c.l.b16 %v1321
        %v1425 = vunpack.c.h.b16 %v1321
        %v1426 = vunpack.c.l.b16 %v1322
        %v1427 = vunpack.c.h.b16 %v1322
        %v1428 = vunpack.c.l.b16 %v1323
        %v1429 = vunpack.c.h.b16 %v1323
        %v1430 = vunpack.c.l.b16 %v1324
        %v1431 = vunpack.c.h.b16 %v1324
        %v1432 = vunpack.c.l.b16 %v1325
        %v1433 = vunpack.c.h.b16 %v1325
        %v1434 = vpack.c.b16 %v1372, %v1370
        %v1435 = vpack.c.b16 %v1373, %v1371
        %v1436 = vpack.c.b16 %v1376, %v1374
        %v1437 = vpack.c.b16 %v1377, %v1375
        %v1438 = vpack.c.b16 %v1380, %v1378
        %v1439 = vpack.c.b16 %v1381, %v1379
        %v1440 = vpack.c.b16 %v1384, %v1382
        %v1441 = vpack.c.b16 %v1385, %v1383
        %v1442 = vpack.c.b16 %v1388, %v1386
        %v1443 = vpack.c.b16 %v1389, %v1387
        %v1444 = vpack.c.b16 %v1392, %v1390
        %v1445 = vpack.c.b16 %v1393, %v1391
        %v1446 = vpack.c.b16 %v1396, %v1394
        %v1447 = vpack.c.b16 %v1397, %v1395
        %v1448 = vpack.c.b16 %v1400, %v1398
        %v1449 = vpack.c.b16 %v1401, %v1399
        %v1450 = vpack.c.b16 %v1404, %v1402
        %v1451 = vpack.c.b16 %v1405, %v1403
        %v1452 = vpack.c.b16 %v1408, %v1406
        %v1453 = vpack.c.b16 %v1409, %v1407
        %v1454 = vpack.c.b16 %v1412, %v1410
        %v1455 = vpack.c.b16 %v1413, %v1411
        %v1456 = vpack.c.b16 %v1416, %v1414
        %v1457 = vpack.c.b16 %v1417, %v1415
        %v1458 = vpack.c.b16 %v1420, %v1418
        %v1459 = vpack.c.b16 %v1421, %v1419
        %v1460 = vpack.c.b16 %v1424, %v1422
        %v1461 = vpack.c.b16 %v1425, %v1423
        %v1462 = vpack.c.b16 %v1428, %v1426
        %v1463 = vpack.c.b16 %v1429, %v1427
        %v1464 = vpack.c.b16 %v1432, %v1430
        %v1465 = vpack.c.b16 %v1433, %v1431
        %1498 = vmatprep.subr.bf16.mxu0 %v1449
        %1499 = vmatpush1.bf16.msra.mxu0 %v1448
        %1500 = vmatprep.subr.bf16.mxu0 %v1447
        %1501 = vmatpush1.bf16.msra.mxu0 %v1446
        %1502 = vmatprep.subr.bf16.mxu0 %v1445
        %1503 = vmatpush1.bf16.msra.mxu0 %v1444
        %1504 = vmatprep.subr.bf16.mxu0 %v1443
        %1505 = vmatpush1.bf16.msra.mxu0 %v1442
        %1506 = vmatprep.subr.bf16.mxu0 %v1441
        %1507 = vmatpush1.bf16.msra.mxu0 %v1440
        %1508 = vmatprep.subr.bf16.mxu0 %v1439
        %1509 = vmatpush1.bf16.msra.mxu0 %v1438
        %1510 = vmatprep.subr.bf16.mxu0 %v1437
        %1511 = vmatpush1.bf16.msra.mxu0 %v1436
        %1512 = vmatprep.subr.bf16.mxu0 %v1435
        %1513 = vmatpush1.bf16.msra.mxu0 %v1434
        %1514 = vmatprep.subr.bf16.mxu0 %v1465
        %1515 = vmatpush2.bf16.msra.mxu0 %v1464
        %1516 = vmatprep.subr.bf16.mxu0 %v1463
        %1517 = vmatpush2.bf16.msra.mxu0 %v1462
        %1518 = vmatprep.subr.bf16.mxu0 %v1461
        %1519 = vmatpush2.bf16.msra.mxu0 %v1460
        %1520 = vmatprep.subr.bf16.mxu0 %v1459
        %1521 = vmatpush2.bf16.msra.mxu0 %v1458
        %1522 = vmatprep.subr.bf16.mxu0 %v1457
        %1523 = vmatpush2.bf16.msra.mxu0 %v1456
        %1524 = vmatprep.subr.bf16.mxu0 %v1455
        %1525 = vmatpush2.bf16.msra.mxu0 %v1454
        %1526 = vmatprep.subr.bf16.mxu0 %v1453
        %1527 = vmatpush2.bf16.msra.mxu0 %v1452
        %1528 = vmatprep.subr.bf16.mxu0 %v1451
        %1529 = vmatpush2.bf16.msra.mxu0 %v1450
        %1530 = vmatprep.mubr.bf16.mxu0 %v1291
        %1531 = vmatmul.mubr.bf16.gmra.mxu0 %v1290
        %v1532 = vpop.f32.mrf.mxu0
        %v1533 = vadd.f32 %v1331, %v1532
        %v1534 = vpop.f32.mrf.mxu0
        %v1535 = vadd.f32 %v1335, %v1534
        %v1536 = vpop.f32.mrf.mxu0
        %v1537 = vadd.f32 %v1331, %v1536
        %v1538 = vpop.f32.mrf.mxu0
        %v1539 = vadd.f32 %v1335, %v1538
        %1540 = vmatprep.mubr.bf16.mxu0 %v1293
        %1541 = vmatmul.mubr.bf16.gmra.mxu0 %v1292
        %v1542 = vpop.f32.mrf.mxu0
        %v1543 = vadd.f32 %v1331, %v1542
        %v1544 = vpop.f32.mrf.mxu0
        %v1545 = vadd.f32 %v1335, %v1544
        %v1546 = vpop.f32.mrf.mxu0
        %v1547 = vadd.f32 %v1331, %v1546
        %v1548 = vpop.f32.mrf.mxu0
        %v1549 = vadd.f32 %v1335, %v1548
        %1550 = vdwg.mxu0
        %v1551 = vmax.f32 %v1533, 0.0
        %v1552 = vmax.f32 %v1535, 0.0
        %v1553 = vmax.f32 %v1537, 0.0
        %v1554 = vmax.f32 %v1539, 0.0
        %v1555 = vmax.f32 %v1543, 0.0
        %v1556 = vmax.f32 %v1545, 0.0
        %v1557 = vmax.f32 %v1547, 0.0
        %v1558 = vmax.f32 %v1549, 0.0
        %v1559 = vpack.c.bf16 %v1553, %v1551
        %v1560 = vpack.c.bf16 %v1554, %v1552
        %v1561 = vpack.c.bf16 %v1557, %v1555
        %v1562 = vpack.c.bf16 %v1558, %v1556
        %v1563 = vld [vmem:[#allocation10] sm:$0xf]
        %v1564 = vld [vmem:[#allocation10 + $0x4] sm:$0xf]
        %v1565 = vld [vmem:[#allocation10 + $0x8] sm:$0xf]
        %v1566 = vld [vmem:[#allocation10 + $0xc] sm:$0xf]
        %v1567 = vld [vmem:[#allocation10 + $0x10] sm:$0xf]
        %v1568 = vld [vmem:[#allocation10 + $0x14] sm:$0xf]
        %v1569 = vld [vmem:[#allocation10 + $0x18] sm:$0xf]
        %v1570 = vld [vmem:[#allocation10 + $0x1c] sm:$0xf]
        %v1571 = vld [vmem:[#allocation10 + $0x20] sm:$0xf]
        %v1572 = vld [vmem:[#allocation10 + $0x24] sm:$0xf]
        %v1573 = vld [vmem:[#allocation10 + $0x28] sm:$0xf]
        %v1574 = vld [vmem:[#allocation10 + $0x2c] sm:$0xf]
        %v1575 = vld [vmem:[#allocation10 + $0x30] sm:$0xf]
        %v1576 = vld [vmem:[#allocation10 + $0x34] sm:$0xf]
        %v1577 = vld [vmem:[#allocation10 + $0x38] sm:$0xf]
        %v1578 = vld [vmem:[#allocation10 + $0x3c] sm:$0xf]
        %v1579 = vld [vmem:[#allocation10 + $0x40] sm:$0xf]
        %v1580 = vld [vmem:[#allocation10 + $0x44] sm:$0xf]
        %v1581 = vld [vmem:[#allocation10 + $0x48] sm:$0xf]
        %v1582 = vld [vmem:[#allocation10 + $0x4c] sm:$0xf]
        %v1583 = vld [vmem:[#allocation10 + $0x50] sm:$0xf]
        %v1584 = vld [vmem:[#allocation10 + $0x54] sm:$0xf]
        %v1585 = vld [vmem:[#allocation10 + $0x58] sm:$0xf]
        %v1586 = vld [vmem:[#allocation10 + $0x5c] sm:$0xf]
        %v1587 = vld [vmem:[#allocation10 + $0x60] sm:$0xf]
        %v1588 = vld [vmem:[#allocation10 + $0x64] sm:$0xf]
        %v1589 = vld [vmem:[#allocation10 + $0x68] sm:$0xf]
        %v1590 = vld [vmem:[#allocation10 + $0x6c] sm:$0xf]
        %v1591 = vld [vmem:[#allocation10 + $0x70] sm:$0xf]
        %v1592 = vld [vmem:[#allocation10 + $0x74] sm:$0xf]
        %v1593 = vld [vmem:[#allocation10 + $0x78] sm:$0xf]
        %v1594 = vld [vmem:[#allocation10 + $0x7c] sm:$0xf]
        %v1595 = vld [vmem:[%s11] sm:$0x1]
        %v1597 = vlaneseq
        %v1598 = vshrl.u32 %v1597, 7
        %v1599 = vsub.s32 0, %v1598
        %v1600 = vrot.slane %v1595, %v1599
        %v1634 = vunpack.c.l.b16 %v1563
        %v1635 = vunpack.c.l.b16 %v1564
        %v1636 = vunpack.c.l.b16 %v1565
        %v1637 = vunpack.c.l.b16 %v1566
        %v1638 = vunpack.c.l.b16 %v1567
        %v1639 = vunpack.c.l.b16 %v1568
        %v1640 = vunpack.c.l.b16 %v1569
        %v1641 = vunpack.c.l.b16 %v1570
        %v1642 = vunpack.c.l.b16 %v1571
        %v1643 = vunpack.c.l.b16 %v1572
        %v1644 = vunpack.c.l.b16 %v1573
        %v1645 = vunpack.c.l.b16 %v1574
        %v1646 = vunpack.c.l.b16 %v1575
        %v1647 = vunpack.c.l.b16 %v1576
        %v1648 = vunpack.c.l.b16 %v1577
        %v1649 = vunpack.c.l.b16 %v1578
        %v1650 = vunpack.c.l.b16 %v1579
        %v1651 = vunpack.c.l.b16 %v1580
        %v1652 = vunpack.c.l.b16 %v1581
        %v1653 = vunpack.c.l.b16 %v1582
        %v1654 = vunpack.c.l.b16 %v1583
        %v1655 = vunpack.c.l.b16 %v1584
        %v1656 = vunpack.c.l.b16 %v1585
        %v1657 = vunpack.c.l.b16 %v1586
        %v1658 = vunpack.c.l.b16 %v1587
        %v1659 = vunpack.c.l.b16 %v1588
        %v1660 = vunpack.c.l.b16 %v1589
        %v1661 = vunpack.c.l.b16 %v1590
        %v1662 = vunpack.c.l.b16 %v1591
        %v1663 = vunpack.c.l.b16 %v1592
        %v1664 = vunpack.c.l.b16 %v1593
        %v1665 = vunpack.c.l.b16 %v1594
        %v1666 = vpack.c.b16 %v1635, %v1634
        %v1667 = vpack.c.b16 %v1637, %v1636
        %v1668 = vpack.c.b16 %v1639, %v1638
        %v1669 = vpack.c.b16 %v1641, %v1640
        %v1670 = vpack.c.b16 %v1643, %v1642
        %v1671 = vpack.c.b16 %v1645, %v1644
        %v1672 = vpack.c.b16 %v1647, %v1646
        %v1673 = vpack.c.b16 %v1649, %v1648
        %v1674 = vpack.c.b16 %v1651, %v1650
        %v1675 = vpack.c.b16 %v1653, %v1652
        %v1676 = vpack.c.b16 %v1655, %v1654
        %v1677 = vpack.c.b16 %v1657, %v1656
        %v1678 = vpack.c.b16 %v1659, %v1658
        %v1679 = vpack.c.b16 %v1661, %v1660
        %v1680 = vpack.c.b16 %v1663, %v1662
        %v1681 = vpack.c.b16 %v1665, %v1664
        %1698 = vmatprep.subr.bf16.mxu0 0
        %1699 = vmatpush1.bf16.msra.mxu0 %v1673
        %1700 = vmatprep.subr.bf16.mxu0 0
        %1701 = vmatpush1.bf16.msra.mxu0 %v1672
        %1702 = vmatprep.subr.bf16.mxu0 0
        %1703 = vmatpush1.bf16.msra.mxu0 %v1671
        %1704 = vmatprep.subr.bf16.mxu0 0
        %1705 = vmatpush1.bf16.msra.mxu0 %v1670
        %1706 = vmatprep.subr.bf16.mxu0 0
        %1707 = vmatpush1.bf16.msra.mxu0 %v1669
        %1708 = vmatprep.subr.bf16.mxu0 0
        %1709 = vmatpush1.bf16.msra.mxu0 %v1668
        %1710 = vmatprep.subr.bf16.mxu0 0
        %1711 = vmatpush1.bf16.msra.mxu0 %v1667
        %1712 = vmatprep.subr.bf16.mxu0 0
        %1713 = vmatpush1.bf16.msra.mxu0 %v1666
        %1714 = vmatprep.subr.bf16.mxu0 0
        %1715 = vmatpush2.bf16.msra.mxu0 %v1681
        %1716 = vmatprep.subr.bf16.mxu0 0
        %1717 = vmatpush2.bf16.msra.mxu0 %v1680
        %1718 = vmatprep.subr.bf16.mxu0 0
        %1719 = vmatpush2.bf16.msra.mxu0 %v1679
        %1720 = vmatprep.subr.bf16.mxu0 0
        %1721 = vmatpush2.bf16.msra.mxu0 %v1678
        %1722 = vmatprep.subr.bf16.mxu0 0
        %1723 = vmatpush2.bf16.msra.mxu0 %v1677
        %1724 = vmatprep.subr.bf16.mxu0 0
        %1725 = vmatpush2.bf16.msra.mxu0 %v1676
        %1726 = vmatprep.subr.bf16.mxu0 0
        %1727 = vmatpush2.bf16.msra.mxu0 %v1675
        %1728 = vmatprep.subr.bf16.mxu0 0
        %1729 = vmatpush2.bf16.msra.mxu0 %v1674
        %1730 = vmatprep.mubr.bf16.mxu0 %v1560
        %1731 = vmatmul.mubr.bf16.gmra.mxu0 %v1559
        %v1732 = vpop.f32.mrf.mxu0
        %v1733 = vadd.f32 %v1600, %v1732
        %v1734 = vpop.f32.mrf.mxu0
        %v1735 = vpop.f32.mrf.mxu0
        %v1736 = vadd.f32 %v1600, %v1735
        %v1737 = vpop.f32.mrf.mxu0
        %1738 = vmatprep.mubr.bf16.mxu0 %v1562
        %1739 = vmatmul.mubr.bf16.gmra.mxu0 %v1561
        %v1740 = vpop.f32.mrf.mxu0
        %v1741 = vadd.f32 %v1600, %v1740
        %v1742 = vpop.f32.mrf.mxu0
        %v1743 = vpop.f32.mrf.mxu0
        %v1744 = vadd.f32 %v1600, %v1743
        %v1745 = vpop.f32.mrf.mxu0
        %1746 = vdwg.mxu0
        %v1747 = vadd.f32 %v1119, %v1733
        %v1748 = vadd.f32 %v1120, %v1736
        %v1749 = vadd.f32 %v1121, %v1741
        %v1750 = vadd.f32 %v1122, %v1744
        %1751 = vst [vmem:[%s480] sm:$0xff] %v1747
        %1752 = vst [vmem:[%s480 + $0x8] sm:$0xff] %v1748
        %1753 = vst [vmem:[%s480 + $0x10] sm:$0xff] %v1749
        %1754 = vst [vmem:[%s480 + $0x18] sm:$0xff] %v1750
        %s1755 = sand.u32 %s294, 1
        %s1756 = scalar_lea.sflag [#allocation4], %s1755
        %s1757 = sand.u32 %s294, 1
        %s1758 = smul.addr %s1757, 32
        %s1759 = scalar_lea.vmem [#allocation11], %s1758
        // Predicated region
        $region89: #{tpu_custom_call.1} parent=67 // pred_check
          %p1760 = pneg %p304
        $region90: #{tpu_custom_call.1} parent=67 // pred_check_branch
          %1762 = sbr.rel (%p1760) target = $region92
        $region91: #{tpu_custom_call.1} parent=67 // pred_region
          %s1763 = smul.u32 4, %s29
          %s1765 = ssub.s32 512, 512
          %1766 = vsyncadd %s1756, %s1765
          %s1767 = smul.addr %s1763, 128
          %s1768 = scalar_lea.hbm %s12, %s1767
          %s1769 = sshll.u32 %s1759, 4
          %s1770 = int_to_ptr.vmem [resolvable:$true] %s1769
          %1775 = dma.vmem_to_hbm [thread:$0]  %s1770, 512, %s1768, %s1756, 128, 128, 8
        $region92: #{tpu_custom_call.1} parent=67 // pred_fallthru
          _
      $region68: #{tpu_custom_call.1} parent=5 // pred_fallthru
        _
      %p1776 = scmp.le.s32.totalorder 2, %s24
      // Predicated region
      $region93: #{tpu_custom_call.1} parent=5 // pred_check
        %p1777 = pneg %p1776
      $region94: #{tpu_custom_call.1} parent=5 // pred_check_branch
        %1779 = sbr.rel (%p1777) target = $region96
      $region95: #{tpu_custom_call.1} parent=5 // pred_region
        %s1780 = ssub.s32 %s24, 2
        // Predicated region
        $region97: #{tpu_custom_call.1} parent=95 // pred_check
          %p1781 = pneg %p310
        $region98: #{tpu_custom_call.1} parent=95 // pred_check_branch
          %1783 = sbr.rel (%p1781) target = $region100
        $region99: #{tpu_custom_call.1} parent=95 // pred_region
          %s1784 = sand.u32 %s295, 1
          %s1785 = scalar_lea.sflag [#allocation4], %s1784
          %s1786 = sand.u32 %s295, 1
          %s1787 = smul.addr %s1786, 32
          %s1788 = scalar_lea.vmem [#allocation11], %s1787
          %1789 = dma.done %s1785, 512
        $region100: #{tpu_custom_call.1} parent=95 // pred_fallthru
          _
      $region96: #{tpu_custom_call.1} parent=5 // pred_fallthru
        _
    $region6: #{tpu_custom_call.1} parent=1 // loop_footer
      %s28 = sadd.s32 1, %s24
    $region7: #{tpu_custom_call.1} parent=1 // loop_footer_branch
      %23 = sbr.rel target = $region3
    $region8: #{tpu_custom_call.1} parent=1 // loop_exit
      _
    %1790 = vsyncpa [#allocation3], 1
    %s1791 = scalar_lea.sflag [#allocation3], 1
    %1792 = vsyncpa %s1791, 1
    %1793 = vsyncpa [#allocation6], 1
    %1794 = vsyncpa [#allocation9], 1
    %1795 = vsyncpa [#allocation4], 1
    %s1796 = scalar_lea.sflag [#allocation4], 1
    %1797 = vsyncpa %s1796, 1

</llo_original>
